<compile_context>
chip_gen: v7x
topology: tpu7x:2x2x1
jax: 0.10.0
libtpu: 0.0.40
codegen_flags: <defaults>
</compile_context>

<pallas_src>
import math
import functools

import numpy as np
import jax
import jax.numpy as jnp
from jax.experimental import pallas as pl
from jax.experimental.pallas import tpu as pltpu

# ---- small synthetic config (consistent with the module's forward) ----------
T = 8            # sequence length (x.size(0))
D_MODEL = 32     # input_dim
N_HEADS = 4      # nhead
HEAD_DIM = D_MODEL // N_HEADS
D_FF = 128       # TODO(synk): PyTorch default dim_feedforward=2048; shrunk to 128 for the small config.
N_LAYERS = 2     # num_layers (shrunk from 4 for the small config)
N_CLASSES = 7
LN_EPS = 1e-5    # nn.LayerNorm default
LANE = 128

MXU_DTYPE = jnp.bfloat16   # MXU operand dtype (f32 accumulation); elementwise math stays f32


# ----------------------------- shared math helpers ------------------------------
def mxu_dot(a, b):
    """a @ b with bf16 MXU operands and f32 accumulation."""
    return jax.lax.dot_general(a.astype(MXU_DTYPE), b.astype(MXU_DTYPE),
                               dimension_numbers=(((1,), (0,)), ((), ())),
                               preferred_element_type=jnp.float32)


def mxu_dot_tb(a, b):
    """a @ b.T (contraction on the LAST dim of both operands; transpose folded into the MXU load)."""
    return jax.lax.dot_general(a.astype(MXU_DTYPE), b.astype(MXU_DTYPE),
                               dimension_numbers=(((1,), (1,)), ((), ())),
                               preferred_element_type=jnp.float32)


def _layer_norm(x, gamma, beta, eps=LN_EPS):
    mu = jnp.mean(x, axis=-1, keepdims=True)
    var = jnp.mean((x - mu) ** 2, axis=-1, keepdims=True)
    return (x - mu) * jax.lax.rsqrt(var + eps) * gamma + beta


def get_sinusoid_encoding_np(n_position, d_hid):
    position = np.arange(n_position, dtype=np.float32)[:, None]
    div_term = np.exp(np.arange(0, d_hid, 2, dtype=np.float32) * -(math.log(10000.0) / d_hid))
    pe = np.zeros((n_position, d_hid), np.float32)
    pe[:, 0::2] = np.sin(position * div_term)
    pe[:, 1::2] = np.cos(position * div_term)
    return pe


# ------------------- compile-time constant slab (numpy, trace time) --------------
def _build_const_slab():
    t, d, hd, ht = T, D_MODEL, HEAD_DIM, N_HEADS * T
    pe = get_sinusoid_encoding_np(t, d)                                            # (T, D)
    row = np.arange(t)[:, None]
    col = np.arange(ht)[None, :]
    causal = np.where((col % t) <= row, 0.0, -1e30).astype(np.float32)             # (T, H*T) finite
    c = np.arange(ht)[:, None]
    sel_cj = ((c % t) == np.arange(t)[None, :]).astype(np.float32)                 # (H*T, T)  replicate rows
    grp = ((np.arange(ht)[:, None] // t) == (np.arange(ht)[None, :] // t)).astype(np.float32)  # (H*T, H*T)
    bd_kd = ((np.arange(ht)[:, None] // t) == (np.arange(d)[None, :] // hd)).astype(np.float32)  # (H*T, D)
    bd_kd2 = np.concatenate([bd_kd, bd_kd], axis=1)                                # (H*T, 2D) masks [k|v]

    rows = 2 * t + 3 * ht                                 # 112 (multiple of 8 for this config)
    slab = np.zeros((rows, LANE), np.float32)
    slab[0:t, 0:d] = pe
    slab[t:2 * t, 0:ht] = causal
    slab[2 * t:2 * t + ht, 0:t] = sel_cj
    slab[2 * t + ht:2 * t + 2 * ht, 0:ht] = grp
    slab[2 * t + 2 * ht:2 * t + 3 * ht, 0:2 * d] = bd_kd2
    return slab


_CONST_SLAB = _build_const_slab()


# ----------------------------- fused Pallas kernel ----------------------------
def fused_transformer_kernel(x_ref, const_ref, w_attn_ref, w_ff_ref, vec_ref, cls_ref, o_ref,
                             *, num_layers, num_heads, head_dim, d_ff):
    t = x_ref.shape[0]
    d = num_heads * head_dim
    ht = num_heads * t

    # ---- unpack the compile-time constant slab (no in-kernel iota chains) -------
    pe = const_ref[0:t, 0:d]                                              # (T, D)
    causal_neg = const_ref[t:2 * t, 0:ht]                                 # (T, H*T)
    sel_cj = const_ref[2 * t:2 * t + ht, 0:t].astype(MXU_DTYPE)           # (H*T, T) bf16, exact 0/1
    grp = const_ref[2 * t + ht:2 * t + 2 * ht, 0:ht].astype(MXU_DTYPE)    # (H*T, H*T) bf16
    bd_kd2 = const_ref[2 * t + 2 * ht:2 * t + 3 * ht, 0:2 * d]            # (H*T, 2D) f32 mask

    # positional-encoding add fused into the kernel
    h = x_ref[...] + pe                                                   # (T, D) f32

    for l in range(num_layers):   # fully unrolled, everything stays VMEM-resident
        wa = w_attn_ref[l]        # (D, 4D) bf16 = [Wq*scale | Wk | Wv | Wo]
        wf = w_ff_ref[l]          # (2D, D_FF) bf16 = [W1 ; W2^T]
        vec = vec_ref[l]          # (8, 128) f32 bias / LN rows

        # --- fused QKV projection: ONE matmul, static lane slices ---------------
        qkv = mxu_dot(h, wa[:, :3 * d]) + vec[0:1, :3 * d]                # (T, 3D); q already scaled
        q = qkv[:, :d]
        kv = qkv[:, d:3 * d]                                              # [k | v] concatenated

        # --- replicate K,V per head with ONE standard matmul (no k.T / XLU) -----
        rep = mxu_dot(sel_cj, kv) * bd_kd2                                # (H*T, 2D)
        k_rep = rep[:, :d]                                                # (H*T, D)
        v_rep = rep[:, d:]                                                # (H*T, D)

        # --- scores: contraction on last dims (trans_b folded into MXU load) ----
        s = mxu_dot_tb(q, k_rep) + causal_neg                             # (T, H*T)
        m = jnp.max(s, axis=-1, keepdims=True)    # global row max: valid shift for every head
        p = jnp.exp(s - m)
        denom = mxu_dot(p, grp)                   # per-head sums broadcast; f32 accumulation
        pn = p * pl.reciprocal(denom, approx=True)                        # EUP divide
        attn = mxu_dot(pn, v_rep)                                         # (T, D), heads concatenated
        attn_out = mxu_dot(attn, wa[:, 3 * d:]) + vec[1:2, :d]            # output projection

        # --- post-norm residual block 1 (f32 elementwise) -----------------------
        y = _layer_norm(h + attn_out, vec[2:3, :d], vec[3:4, :d])

        # --- ReLU feed-forward (W2 via trans_b matmul; dropout = identity) ------
        hdn = jnp.maximum(mxu_dot(y, wf[:d, :]) + vec[4:5, :d_ff], 0.0)   # (T, D_FF)
        ff = mxu_dot_tb(hdn, wf[d:, :]) + vec[5:6, :d]                    # (T, D)

        # --- post-norm residual block 2 ------------------------------------------
        h = _layer_norm(y + ff, vec[6:7, :d], vec[7:8, :d])

    # --- classifier head: lane-dense (T, 128) store; wrapper slices to N_CLASSES ---
    o_ref[...] = mxu_dot(h, cls_ref[0:d, :]) + cls_ref[d:d + 1, :]


# ----------------------------- packing + wrapper ---------------------------------
_VMEM_SPEC = pl.BlockSpec(memory_space=pltpu.MemorySpace.VMEM)


def _pad_row(v, width=LANE):
    v = v.reshape(1, -1).astype(jnp.float32)
    return jnp.pad(v, ((0, 0), (0, width - v.shape[1])))


def pack_params(layer_params, cls_w, cls_b):
    scale = 1.0 / math.sqrt(HEAD_DIM)
    w_attn, w_ff, vec = [], [], []
    for p in layer_params:
        wq_scaled = (p["wq"].astype(jnp.float32) * scale).astype(MXU_DTYPE)   # fold 1/sqrt(hd) into Wq
        w_attn.append(jnp.concatenate([wq_scaled, p["wk"], p["wv"], p["wo"]], axis=1))   # (D, 4D)
        w_ff.append(jnp.concatenate([p["w1"], p["w2"].T], axis=0))                        # (2D, D_FF)
        b_qkv = jnp.concatenate([p["bq"] * scale, p["bk"], p["bv"]], axis=1)              # scale folded into bq
        vec.append(jnp.concatenate(
            [_pad_row(b_qkv), _pad_row(p["bo"]), _pad_row(p["ln1_g"]), _pad_row(p["ln1_b"]),
             _pad_row(p["b1"]), _pad_row(p["b2"]), _pad_row(p["ln2_g"]), _pad_row(p["ln2_b"])], axis=0))
    w_attn = jnp.stack(w_attn)                       # (L, D, 4D) bf16
    w_ff = jnp.stack(w_ff)                           # (L, 2D, D_FF) bf16
    vec = jnp.stack(vec)                             # (L, 8, 128) f32
    # classifier slab: rows 0:D = W (lane-padded), row D = bias, pad rows to multiple of 8
    cw = jnp.pad(cls_w.astype(jnp.float32), ((0, 0), (0, LANE - N_CLASSES)))
    cb = jnp.pad(cls_b.astype(jnp.float32), ((0, 0), (0, LANE - N_CLASSES)))
    cls = jnp.concatenate([cw, cb, jnp.zeros((7, LANE), jnp.float32)], axis=0)  # (D+8, 128)
    return w_attn, w_ff, vec, cls


@jax.jit
def causal_transformer_forward(x, layer_params, cls_w, cls_b):
    w_attn, w_ff, vec, cls = pack_params(layer_params, cls_w, cls_b)
    consts = jnp.asarray(_CONST_SLAB)                # compile-time constant slab (one DMA)
    kernel = functools.partial(fused_transformer_kernel,
                               num_layers=N_LAYERS, num_heads=N_HEADS,
                               head_dim=HEAD_DIM, d_ff=D_FF)
    out_padded = pl.pallas_call(
        kernel,
        out_shape=jax.ShapeDtypeStruct((x.shape[0], LANE), jnp.float32),
        in_specs=[_VMEM_SPEC] * 6,
        out_specs=_VMEM_SPEC,
    )(x, consts, w_attn, w_ff, vec, cls)
    return out_padded[:, :N_CLASSES]


# ----------------------------- pure-JAX reference -------------------------------
def reference_forward(x, layer_params, cls_w, cls_b):
    """Structurally independent reference (per-head loop, jax.nn.softmax, unpacked weights).

    Mirrors the kernel's MXU operand precision (bf16 operands, f32 accumulation) via mxu_dot,
    so the assert checks the fused-kernel structure rather than bf16 rounding."""
    h = x + jnp.asarray(get_sinusoid_encoding_np(x.shape[0], x.shape[1]))
    t = x.shape[0]
    allowed = jnp.tril(jnp.ones((t, t), jnp.bool_))
    scale = 1.0 / math.sqrt(HEAD_DIM)
    for p in layer_params:
        q = (mxu_dot(h, p["wq"]) + p["bq"]) * scale
        k = mxu_dot(h, p["wk"]) + p["bk"]
        v = mxu_dot(h, p["wv"]) + p["bv"]
        attn = jnp.zeros_like(h)
        for hh in range(N_HEADS):
            sl = slice(hh * HEAD_DIM, (hh + 1) * HEAD_DIM)
            s = mxu_dot(q[:, sl], k[:, sl].T)
            s = jnp.where(allowed, s, -1e30)
            pr = jax.nn.softmax(s, axis=-1)
            attn = attn.at[:, sl].set(mxu_dot(pr, v[:, sl]))
        attn_out = mxu_dot(attn, p["wo"]) + p["bo"]
        y = _layer_norm(h + attn_out, p["ln1_g"], p["ln1_b"])
        ff = mxu_dot(jnp.maximum(mxu_dot(y, p["w1"]) + p["b1"], 0.0), p["w2"]) + p["b2"]
        h = _layer_norm(y + ff, p["ln2_g"], p["ln2_b"])
    return mxu_dot(h, cls_w) + cls_b


# ----------------------------- parameter init -----------------------------------
def _linear_init(key, d_in, d_out):
    k1, k2 = jax.random.split(key)
    bound = 1.0 / math.sqrt(d_in)
    w = jax.random.uniform(k1, (d_in, d_out), jnp.float32, -bound, bound).astype(MXU_DTYPE)
    b = jax.random.uniform(k2, (1, d_out), jnp.float32, -bound, bound)
    return w, b


def init_layer_params(key):
    ks = jax.random.split(key, 6)
    wq, bq = _linear_init(ks[0], D_MODEL, D_MODEL)
    wk, bk = _linear_init(ks[1], D_MODEL, D_MODEL)
    wv, bv = _linear_init(ks[2], D_MODEL, D_MODEL)
    wo, bo = _linear_init(ks[3], D_MODEL, D_MODEL)
    w1, b1 = _linear_init(ks[4], D_MODEL, D_FF)
    w2, b2 = _linear_init(ks[5], D_FF, D_MODEL)
    return dict(
        wq=wq, bq=bq, wk=wk, bk=bk, wv=wv, bv=bv, wo=wo, bo=bo,
        ln1_g=jnp.ones((1, D_MODEL), jnp.float32),
        ln1_b=jnp.zeros((1, D_MODEL), jnp.float32),
        w1=w1, b1=b1, w2=w2, b2=b2,
        ln2_g=jnp.ones((1, D_MODEL), jnp.float32),
        ln2_b=jnp.zeros((1, D_MODEL), jnp.float32),
    )


if __name__ == "__main__":
    root = jax.random.PRNGKey(0)
    k_x, k_cls, *k_layers = jax.random.split(root, 2 + N_LAYERS)

    x = jax.random.normal(k_x, (T, D_MODEL), jnp.float32)
    layer_params = [init_layer_params(k) for k in k_layers]
    cls_w, cls_b = _linear_init(k_cls, D_MODEL, N_CLASSES)

    out = jax.block_until_ready(causal_transformer_forward(x, layer_params, cls_w, cls_b))
    ref = jax.block_until_ready(reference_forward(x, layer_params, cls_w, cls_b))

    assert out.shape == (T, N_CLASSES), out.shape
    # tolerance leaves headroom for the EUP approximate reciprocal, bf16 operand rounding
    # (incl. the scale folded into Wq) and matmul reassociation
    np.testing.assert_allclose(np.asarray(out), np.asarray(ref),
                               rtol=2e-2, atol=2e-2)
    print("KERNEL_OK")
</pallas_src>

<mosaic_0001>
module attributes {stable_mosaic.version = 11 : i64} {
  func.func @fused_transformer_kernel(%arg0: memref<8x32xf32, #tpu.memory_space<vmem>>, %arg1: memref<112x128xf32, #tpu.memory_space<vmem>>, %arg2: memref<2x32x128xbf16, #tpu.memory_space<vmem>>, %arg3: memref<2x64x128xbf16, #tpu.memory_space<vmem>>, %arg4: memref<2x8x128xf32, #tpu.memory_space<vmem>>, %arg5: memref<40x128xf32, #tpu.memory_space<vmem>>, %arg6: memref<8x128xf32, #tpu.memory_space<vmem>>) attributes {dimension_semantics = [], scalar_prefetch = 0 : i64, scratch_operands = 0 : i64, tpu.core_type = #tpu.core_type<tc>} {
    %c0 = arith.constant 0 : index
    %c0_0 = arith.constant 0 : index
    %0 = vector.load %arg1[%c0, %c0_0] : memref<112x128xf32, #tpu.memory_space<vmem>>, vector<8x32xf32>
    %c8 = arith.constant 8 : index
    %c0_1 = arith.constant 0 : index
    %1 = vector.load %arg1[%c8, %c0_1] : memref<112x128xf32, #tpu.memory_space<vmem>>, vector<8x32xf32>
    %c16 = arith.constant 16 : index
    %c0_2 = arith.constant 0 : index
    %2 = vector.load %arg1[%c16, %c0_2] : memref<112x128xf32, #tpu.memory_space<vmem>>, vector<32x8xf32>
    %3 = arith.truncf %2 : vector<32x8xf32> to vector<32x8xbf16>
    %c48 = arith.constant 48 : index
    %c0_3 = arith.constant 0 : index
    %4 = vector.load %arg1[%c48, %c0_3] : memref<112x128xf32, #tpu.memory_space<vmem>>, vector<32x32xf32>
    %5 = arith.truncf %4 : vector<32x32xf32> to vector<32x32xbf16>
    %c80 = arith.constant 80 : index
    %c0_4 = arith.constant 0 : index
    %6 = vector.load %arg1[%c80, %c0_4] : memref<112x128xf32, #tpu.memory_space<vmem>>, vector<32x64xf32>
    %c0_5 = arith.constant 0 : index
    %c0_6 = arith.constant 0 : index
    %7 = vector.load %arg0[%c0_5, %c0_6] : memref<8x32xf32, #tpu.memory_space<vmem>>, vector<8x32xf32>
    %8 = arith.addf %7, %0 : vector<8x32xf32>
    %c0_7 = arith.constant 0 : index
    %c0_8 = arith.constant 0 : index
    %c0_9 = arith.constant 0 : index
    %9 = vector.load %arg2[%c0_7, %c0_8, %c0_9] : memref<2x32x128xbf16, #tpu.memory_space<vmem>>, vector<1x32x128xbf16>
    %10 = vector.shape_cast %9 : vector<1x32x128xbf16> to vector<32x128xbf16>
    %c0_10 = arith.constant 0 : index
    %c0_11 = arith.constant 0 : index
    %c0_12 = arith.constant 0 : index
    %11 = vector.load %arg3[%c0_10, %c0_11, %c0_12] : memref<2x64x128xbf16, #tpu.memory_space<vmem>>, vector<1x64x128xbf16>
    %12 = vector.shape_cast %11 : vector<1x64x128xbf16> to vector<64x128xbf16>
    %c0_13 = arith.constant 0 : index
    %c0_14 = arith.constant 0 : index
    %c0_15 = arith.constant 0 : index
    %13 = vector.load %arg4[%c0_13, %c0_14, %c0_15] : memref<2x8x128xf32, #tpu.memory_space<vmem>>, vector<1x8x128xf32>
    %14 = vector.shape_cast %13 : vector<1x8x128xf32> to vector<8x128xf32>
    %15 = vector.extract_strided_slice %10 {offsets = [0, 0], sizes = [32, 96], strides = [1, 1]} : vector<32x128xbf16> to vector<32x96xbf16>
    %16 = arith.truncf %8 : vector<8x32xf32> to vector<8x32xbf16>
    %cst = arith.constant dense<0.000000e+00> : vector<8x96xf32>
    %17 = tpu.matmul %16, %15, %cst {dimension_numbers = #tpu.dot_dimension_numbers<[1], [0], [0], [1], [0, 0, 1, 1], [], []>} : vector<8x32xbf16>, vector<32x96xbf16>, vector<8x96xf32> -> vector<8x96xf32>
    %18 = vector.extract_strided_slice %14 {offsets = [0, 0], sizes = [1, 96], strides = [1, 1]} : vector<8x128xf32> to vector<1x96xf32>
    %19 = vector.broadcast %18 : vector<1x96xf32> to vector<8x96xf32>
    %20 = arith.addf %17, %19 : vector<8x96xf32>
    %21 = vector.extract_strided_slice %20 {offsets = [0, 0], sizes = [8, 32], strides = [1, 1]} : vector<8x96xf32> to vector<8x32xf32>
    %22 = vector.extract_strided_slice %20 {offsets = [0, 32], sizes = [8, 64], strides = [1, 1]} : vector<8x96xf32> to vector<8x64xf32>
    %23 = arith.truncf %22 : vector<8x64xf32> to vector<8x64xbf16>
    %cst_16 = arith.constant dense<0.000000e+00> : vector<32x64xf32>
    %24 = tpu.matmul %3, %23, %cst_16 {dimension_numbers = #tpu.dot_dimension_numbers<[1], [0], [0], [1], [0, 0, 1, 1], [], []>} : vector<32x8xbf16>, vector<8x64xbf16>, vector<32x64xf32> -> vector<32x64xf32>
    %25 = arith.mulf %24, %6 : vector<32x64xf32>
    %26 = vector.extract_strided_slice %25 {offsets = [0, 0], sizes = [32, 32], strides = [1, 1]} : vector<32x64xf32> to vector<32x32xf32>
    %27 = vector.extract_strided_slice %25 {offsets = [0, 32], sizes = [32, 32], strides = [1, 1]} : vector<32x64xf32> to vector<32x32xf32>
    %28 = arith.truncf %21 : vector<8x32xf32> to vector<8x32xbf16>
    %29 = arith.truncf %26 : vector<32x32xf32> to vector<32x32xbf16>
    %cst_17 = arith.constant dense<0.000000e+00> : vector<8x32xf32>
    %30 = tpu.matmul %28, %29, %cst_17 {dimension_numbers = #tpu.dot_dimension_numbers<[1], [1], [0], [0], [0, 0, 1, 0], [], []>} : vector<8x32xbf16>, vector<32x32xbf16>, vector<8x32xf32> -> vector<8x32xf32>
    %31 = arith.addf %30, %1 : vector<8x32xf32>
    %cst_18 = arith.constant dense<0xFF800000> : vector<8xf32>
    %32 = vector.multi_reduction <maximumf>, %31, %cst_18 [1] : vector<8x32xf32> to vector<8xf32>
    %33 = vector.shape_cast %32 : vector<8xf32> to vector<8x1xf32>
    %34 = vector.broadcast %33 : vector<8x1xf32> to vector<8x32xf32>
    %35 = arith.subf %31, %34 : vector<8x32xf32>
    %36 = math.exp %35 : vector<8x32xf32>
    %37 = arith.truncf %36 : vector<8x32xf32> to vector<8x32xbf16>
    %cst_19 = arith.constant dense<0.000000e+00> : vector<8x32xf32>
    %38 = tpu.matmul %37, %5, %cst_19 {dimension_numbers = #tpu.dot_dimension_numbers<[1], [0], [0], [1], [0, 0, 1, 1], [], []>} : vector<8x32xbf16>, vector<32x32xbf16>, vector<8x32xf32> -> vector<8x32xf32>
    %39 = tpu.reciprocal %38 {approx = true} : vector<8x32xf32> -> vector<8x32xf32>
    %40 = arith.mulf %36, %39 : vector<8x32xf32>
    %41 = arith.truncf %40 : vector<8x32xf32> to vector<8x32xbf16>
    %42 = arith.truncf %27 : vector<32x32xf32> to vector<32x32xbf16>
    %cst_20 = arith.constant dense<0.000000e+00> : vector<8x32xf32>
    %43 = tpu.matmul %41, %42, %cst_20 {dimension_numbers = #tpu.dot_dimension_numbers<[1], [0], [0], [1], [0, 0, 1, 1], [], []>} : vector<8x32xbf16>, vector<32x32xbf16>, vector<8x32xf32> -> vector<8x32xf32>
    %44 = vector.extract_strided_slice %10 {offsets = [0, 96], sizes = [32, 32], strides = [1, 1]} : vector<32x128xbf16> to vector<32x32xbf16>
    %45 = arith.truncf %43 : vector<8x32xf32> to vector<8x32xbf16>
    %cst_21 = arith.constant dense<0.000000e+00> : vector<8x32xf32>
    %46 = tpu.matmul %45, %44, %cst_21 {dimension_numbers = #tpu.dot_dimension_numbers<[1], [0], [0], [1], [0, 0, 1, 1], [], []>} : vector<8x32xbf16>, vector<32x32xbf16>, vector<8x32xf32> -> vector<8x32xf32>
    %47 = vector.extract_strided_slice %14 {offsets = [1, 0], sizes = [1, 32], strides = [1, 1]} : vector<8x128xf32> to vector<1x32xf32>
    %48 = vector.broadcast %47 : vector<1x32xf32> to vector<8x32xf32>
    %49 = arith.addf %46, %48 : vector<8x32xf32>
    %50 = arith.addf %8, %49 : vector<8x32xf32>
    %51 = vector.extract_strided_slice %14 {offsets = [2, 0], sizes = [1, 32], strides = [1, 1]} : vector<8x128xf32> to vector<1x32xf32>
    %52 = vector.extract_strided_slice %14 {offsets = [3, 0], sizes = [1, 32], strides = [1, 1]} : vector<8x128xf32> to vector<1x32xf32>
    %cst_22 = arith.constant dense<0.000000e+00> : vector<8xf32>
    %53 = vector.multi_reduction <add>, %50, %cst_22 [1] : vector<8x32xf32> to vector<8xf32>
    %54 = vector.shape_cast %53 : vector<8xf32> to vector<8x1xf32>
    %cst_23 = arith.constant 3.200000e+01 : f32
    %55 = vector.broadcast %cst_23 : f32 to vector<8x1xf32>
    %56 = arith.divf %54, %55 : vector<8x1xf32>
    %57 = vector.broadcast %56 : vector<8x1xf32> to vector<8x32xf32>
    %58 = arith.subf %50, %57 : vector<8x32xf32>
    %59 = arith.mulf %58, %58 : vector<8x32xf32>
    %cst_24 = arith.constant dense<0.000000e+00> : vector<8xf32>
    %60 = vector.multi_reduction <add>, %59, %cst_24 [1] : vector<8x32xf32> to vector<8xf32>
    %61 = vector.shape_cast %60 : vector<8xf32> to vector<8x1xf32>
    %cst_25 = arith.constant 3.200000e+01 : f32
    %62 = vector.broadcast %cst_25 : f32 to vector<8x1xf32>
    %63 = arith.divf %61, %62 : vector<8x1xf32>
    %64 = vector.broadcast %56 : vector<8x1xf32> to vector<8x32xf32>
    %65 = arith.subf %50, %64 : vector<8x32xf32>
    %cst_26 = arith.constant 9.99999974E-6 : f32
    %66 = vector.broadcast %cst_26 : f32 to vector<8x1xf32>
    %67 = arith.addf %63, %66 : vector<8x1xf32>
    %68 = math.rsqrt %67 : vector<8x1xf32>
    %69 = vector.broadcast %68 : vector<8x1xf32> to vector<8x32xf32>
    %70 = arith.mulf %65, %69 : vector<8x32xf32>
    %71 = vector.broadcast %51 : vector<1x32xf32> to vector<8x32xf32>
    %72 = arith.mulf %70, %71 : vector<8x32xf32>
    %73 = vector.broadcast %52 : vector<1x32xf32> to vector<8x32xf32>
    %74 = arith.addf %72, %73 : vector<8x32xf32>
    %75 = vector.extract_strided_slice %12 {offsets = [0, 0], sizes = [32, 128], strides = [1, 1]} : vector<64x128xbf16> to vector<32x128xbf16>
    %76 = arith.truncf %74 : vector<8x32xf32> to vector<8x32xbf16>
    %cst_27 = arith.constant dense<0.000000e+00> : vector<8x128xf32>
    %77 = tpu.matmul %76, %75, %cst_27 {dimension_numbers = #tpu.dot_dimension_numbers<[1], [0], [0], [1], [0, 0, 1, 1], [], []>} : vector<8x32xbf16>, vector<32x128xbf16>, vector<8x128xf32> -> vector<8x128xf32>
    %78 = vector.extract_strided_slice %14 {offsets = [4, 0], sizes = [1, 128], strides = [1, 1]} : vector<8x128xf32> to vector<1x128xf32>
    %79 = vector.broadcast %78 : vector<1x128xf32> to vector<8x128xf32>
    %80 = arith.addf %77, %79 : vector<8x128xf32>
    %cst_28 = arith.constant 0.000000e+00 : f32
    %81 = vector.broadcast %cst_28 : f32 to vector<8x128xf32>
    %82 = arith.maximumf %80, %81 : vector<8x128xf32>
    %83 = vector.extract_strided_slice %12 {offsets = [32, 0], sizes = [32, 128], strides = [1, 1]} : vector<64x128xbf16> to vector<32x128xbf16>
    %84 = arith.truncf %82 : vector<8x128xf32> to vector<8x128xbf16>
    %cst_29 = arith.constant dense<0.000000e+00> : vector<8x32xf32>
    %85 = tpu.matmul %84, %83, %cst_29 {dimension_numbers = #tpu.dot_dimension_numbers<[1], [1], [0], [0], [0, 0, 1, 0], [], []>} : vector<8x128xbf16>, vector<32x128xbf16>, vector<8x32xf32> -> vector<8x32xf32>
    %86 = vector.extract_strided_slice %14 {offsets = [5, 0], sizes = [1, 32], strides = [1, 1]} : vector<8x128xf32> to vector<1x32xf32>
    %87 = vector.broadcast %86 : vector<1x32xf32> to vector<8x32xf32>
    %88 = arith.addf %85, %87 : vector<8x32xf32>
    %89 = arith.addf %74, %88 : vector<8x32xf32>
    %90 = vector.extract_strided_slice %14 {offsets = [6, 0], sizes = [1, 32], strides = [1, 1]} : vector<8x128xf32> to vector<1x32xf32>
    %91 = vector.extract_strided_slice %14 {offsets = [7, 0], sizes = [1, 32], strides = [1, 1]} : vector<8x128xf32> to vector<1x32xf32>
    %cst_30 = arith.constant dense<0.000000e+00> : vector<8xf32>
    %92 = vector.multi_reduction <add>, %89, %cst_30 [1] : vector<8x32xf32> to vector<8xf32>
    %93 = vector.shape_cast %92 : vector<8xf32> to vector<8x1xf32>
    %cst_31 = arith.constant 3.200000e+01 : f32
    %94 = vector.broadcast %cst_31 : f32 to vector<8x1xf32>
    %95 = arith.divf %93, %94 : vector<8x1xf32>
    %96 = vector.broadcast %95 : vector<8x1xf32> to vector<8x32xf32>
    %97 = arith.subf %89, %96 : vector<8x32xf32>
    %98 = arith.mulf %97, %97 : vector<8x32xf32>
    %cst_32 = arith.constant dense<0.000000e+00> : vector<8xf32>
    %99 = vector.multi_reduction <add>, %98, %cst_32 [1] : vector<8x32xf32> to vector<8xf32>
    %100 = vector.shape_cast %99 : vector<8xf32> to vector<8x1xf32>
    %cst_33 = arith.constant 3.200000e+01 : f32
    %101 = vector.broadcast %cst_33 : f32 to vector<8x1xf32>
    %102 = arith.divf %100, %101 : vector<8x1xf32>
    %103 = vector.broadcast %95 : vector<8x1xf32> to vector<8x32xf32>
    %104 = arith.subf %89, %103 : vector<8x32xf32>
    %cst_34 = arith.constant 9.99999974E-6 : f32
    %105 = vector.broadcast %cst_34 : f32 to vector<8x1xf32>
    %106 = arith.addf %102, %105 : vector<8x1xf32>
    %107 = math.rsqrt %106 : vector<8x1xf32>
    %108 = vector.broadcast %107 : vector<8x1xf32> to vector<8x32xf32>
    %109 = arith.mulf %104, %108 : vector<8x32xf32>
    %110 = vector.broadcast %90 : vector<1x32xf32> to vector<8x32xf32>
    %111 = arith.mulf %109, %110 : vector<8x32xf32>
    %112 = vector.broadcast %91 : vector<1x32xf32> to vector<8x32xf32>
    %113 = arith.addf %111, %112 : vector<8x32xf32>
    %c1 = arith.constant 1 : index
    %c0_35 = arith.constant 0 : index
    %c0_36 = arith.constant 0 : index
    %114 = vector.load %arg2[%c1, %c0_35, %c0_36] : memref<2x32x128xbf16, #tpu.memory_space<vmem>>, vector<1x32x128xbf16>
    %115 = vector.shape_cast %114 : vector<1x32x128xbf16> to vector<32x128xbf16>
    %c1_37 = arith.constant 1 : index
    %c0_38 = arith.constant 0 : index
    %c0_39 = arith.constant 0 : index
    %116 = vector.load %arg3[%c1_37, %c0_38, %c0_39] : memref<2x64x128xbf16, #tpu.memory_space<vmem>>, vector<1x64x128xbf16>
    %117 = vector.shape_cast %116 : vector<1x64x128xbf16> to vector<64x128xbf16>
    %c1_40 = arith.constant 1 : index
    %c0_41 = arith.constant 0 : index
    %c0_42 = arith.constant 0 : index
    %118 = vector.load %arg4[%c1_40, %c0_41, %c0_42] : memref<2x8x128xf32, #tpu.memory_space<vmem>>, vector<1x8x128xf32>
    %119 = vector.shape_cast %118 : vector<1x8x128xf32> to vector<8x128xf32>
    %120 = vector.extract_strided_slice %115 {offsets = [0, 0], sizes = [32, 96], strides = [1, 1]} : vector<32x128xbf16> to vector<32x96xbf16>
    %121 = arith.truncf %113 : vector<8x32xf32> to vector<8x32xbf16>
    %cst_43 = arith.constant dense<0.000000e+00> : vector<8x96xf32>
    %122 = tpu.matmul %121, %120, %cst_43 {dimension_numbers = #tpu.dot_dimension_numbers<[1], [0], [0], [1], [0, 0, 1, 1], [], []>} : vector<8x32xbf16>, vector<32x96xbf16>, vector<8x96xf32> -> vector<8x96xf32>
    %123 = vector.extract_strided_slice %119 {offsets = [0, 0], sizes = [1, 96], strides = [1, 1]} : vector<8x128xf32> to vector<1x96xf32>
    %124 = vector.broadcast %123 : vector<1x96xf32> to vector<8x96xf32>
    %125 = arith.addf %122, %124 : vector<8x96xf32>
    %126 = vector.extract_strided_slice %125 {offsets = [0, 0], sizes = [8, 32], strides = [1, 1]} : vector<8x96xf32> to vector<8x32xf32>
    %127 = vector.extract_strided_slice %125 {offsets = [0, 32], sizes = [8, 64], strides = [1, 1]} : vector<8x96xf32> to vector<8x64xf32>
    %128 = arith.truncf %127 : vector<8x64xf32> to vector<8x64xbf16>
    %cst_44 = arith.constant dense<0.000000e+00> : vector<32x64xf32>
    %129 = tpu.matmul %3, %128, %cst_44 {dimension_numbers = #tpu.dot_dimension_numbers<[1], [0], [0], [1], [0, 0, 1, 1], [], []>} : vector<32x8xbf16>, vector<8x64xbf16>, vector<32x64xf32> -> vector<32x64xf32>
    %130 = arith.mulf %129, %6 : vector<32x64xf32>
    %131 = vector.extract_strided_slice %130 {offsets = [0, 0], sizes = [32, 32], strides = [1, 1]} : vector<32x64xf32> to vector<32x32xf32>
    %132 = vector.extract_strided_slice %130 {offsets = [0, 32], sizes = [32, 32], strides = [1, 1]} : vector<32x64xf32> to vector<32x32xf32>
    %133 = arith.truncf %126 : vector<8x32xf32> to vector<8x32xbf16>
    %134 = arith.truncf %131 : vector<32x32xf32> to vector<32x32xbf16>
    %cst_45 = arith.constant dense<0.000000e+00> : vector<8x32xf32>
    %135 = tpu.matmul %133, %134, %cst_45 {dimension_numbers = #tpu.dot_dimension_numbers<[1], [1], [0], [0], [0, 0, 1, 0], [], []>} : vector<8x32xbf16>, vector<32x32xbf16>, vector<8x32xf32> -> vector<8x32xf32>
    %136 = arith.addf %135, %1 : vector<8x32xf32>
    %cst_46 = arith.constant dense<0xFF800000> : vector<8xf32>
    %137 = vector.multi_reduction <maximumf>, %136, %cst_46 [1] : vector<8x32xf32> to vector<8xf32>
    %138 = vector.shape_cast %137 : vector<8xf32> to vector<8x1xf32>
    %139 = vector.broadcast %138 : vector<8x1xf32> to vector<8x32xf32>
    %140 = arith.subf %136, %139 : vector<8x32xf32>
    %141 = math.exp %140 : vector<8x32xf32>
    %142 = arith.truncf %141 : vector<8x32xf32> to vector<8x32xbf16>
    %cst_47 = arith.constant dense<0.000000e+00> : vector<8x32xf32>
    %143 = tpu.matmul %142, %5, %cst_47 {dimension_numbers = #tpu.dot_dimension_numbers<[1], [0], [0], [1], [0, 0, 1, 1], [], []>} : vector<8x32xbf16>, vector<32x32xbf16>, vector<8x32xf32> -> vector<8x32xf32>
    %144 = tpu.reciprocal %143 {approx = true} : vector<8x32xf32> -> vector<8x32xf32>
    %145 = arith.mulf %141, %144 : vector<8x32xf32>
    %146 = arith.truncf %145 : vector<8x32xf32> to vector<8x32xbf16>
    %147 = arith.truncf %132 : vector<32x32xf32> to vector<32x32xbf16>
    %cst_48 = arith.constant dense<0.000000e+00> : vector<8x32xf32>
    %148 = tpu.matmul %146, %147, %cst_48 {dimension_numbers = #tpu.dot_dimension_numbers<[1], [0], [0], [1], [0, 0, 1, 1], [], []>} : vector<8x32xbf16>, vector<32x32xbf16>, vector<8x32xf32> -> vector<8x32xf32>
    %149 = vector.extract_strided_slice %115 {offsets = [0, 96], sizes = [32, 32], strides = [1, 1]} : vector<32x128xbf16> to vector<32x32xbf16>
    %150 = arith.truncf %148 : vector<8x32xf32> to vector<8x32xbf16>
    %cst_49 = arith.constant dense<0.000000e+00> : vector<8x32xf32>
    %151 = tpu.matmul %150, %149, %cst_49 {dimension_numbers = #tpu.dot_dimension_numbers<[1], [0], [0], [1], [0, 0, 1, 1], [], []>} : vector<8x32xbf16>, vector<32x32xbf16>, vector<8x32xf32> -> vector<8x32xf32>
    %152 = vector.extract_strided_slice %119 {offsets = [1, 0], sizes = [1, 32], strides = [1, 1]} : vector<8x128xf32> to vector<1x32xf32>
    %153 = vector.broadcast %152 : vector<1x32xf32> to vector<8x32xf32>
    %154 = arith.addf %151, %153 : vector<8x32xf32>
    %155 = arith.addf %113, %154 : vector<8x32xf32>
    %156 = vector.extract_strided_slice %119 {offsets = [2, 0], sizes = [1, 32], strides = [1, 1]} : vector<8x128xf32> to vector<1x32xf32>
    %157 = vector.extract_strided_slice %119 {offsets = [3, 0], sizes = [1, 32], strides = [1, 1]} : vector<8x128xf32> to vector<1x32xf32>
    %cst_50 = arith.constant dense<0.000000e+00> : vector<8xf32>
    %158 = vector.multi_reduction <add>, %155, %cst_50 [1] : vector<8x32xf32> to vector<8xf32>
    %159 = vector.shape_cast %158 : vector<8xf32> to vector<8x1xf32>
    %cst_51 = arith.constant 3.200000e+01 : f32
    %160 = vector.broadcast %cst_51 : f32 to vector<8x1xf32>
    %161 = arith.divf %159, %160 : vector<8x1xf32>
    %162 = vector.broadcast %161 : vector<8x1xf32> to vector<8x32xf32>
    %163 = arith.subf %155, %162 : vector<8x32xf32>
    %164 = arith.mulf %163, %163 : vector<8x32xf32>
    %cst_52 = arith.constant dense<0.000000e+00> : vector<8xf32>
    %165 = vector.multi_reduction <add>, %164, %cst_52 [1] : vector<8x32xf32> to vector<8xf32>
    %166 = vector.shape_cast %165 : vector<8xf32> to vector<8x1xf32>
    %cst_53 = arith.constant 3.200000e+01 : f32
    %167 = vector.broadcast %cst_53 : f32 to vector<8x1xf32>
    %168 = arith.divf %166, %167 : vector<8x1xf32>
    %169 = vector.broadcast %161 : vector<8x1xf32> to vector<8x32xf32>
    %170 = arith.subf %155, %169 : vector<8x32xf32>
    %cst_54 = arith.constant 9.99999974E-6 : f32
    %171 = vector.broadcast %cst_54 : f32 to vector<8x1xf32>
    %172 = arith.addf %168, %171 : vector<8x1xf32>
    %173 = math.rsqrt %172 : vector<8x1xf32>
    %174 = vector.broadcast %173 : vector<8x1xf32> to vector<8x32xf32>
    %175 = arith.mulf %170, %174 : vector<8x32xf32>
    %176 = vector.broadcast %156 : vector<1x32xf32> to vector<8x32xf32>
    %177 = arith.mulf %175, %176 : vector<8x32xf32>
    %178 = vector.broadcast %157 : vector<1x32xf32> to vector<8x32xf32>
    %179 = arith.addf %177, %178 : vector<8x32xf32>
    %180 = vector.extract_strided_slice %117 {offsets = [0, 0], sizes = [32, 128], strides = [1, 1]} : vector<64x128xbf16> to vector<32x128xbf16>
    %181 = arith.truncf %179 : vector<8x32xf32> to vector<8x32xbf16>
    %cst_55 = arith.constant dense<0.000000e+00> : vector<8x128xf32>
    %182 = tpu.matmul %181, %180, %cst_55 {dimension_numbers = #tpu.dot_dimension_numbers<[1], [0], [0], [1], [0, 0, 1, 1], [], []>} : vector<8x32xbf16>, vector<32x128xbf16>, vector<8x128xf32> -> vector<8x128xf32>
    %183 = vector.extract_strided_slice %119 {offsets = [4, 0], sizes = [1, 128], strides = [1, 1]} : vector<8x128xf32> to vector<1x128xf32>
    %184 = vector.broadcast %183 : vector<1x128xf32> to vector<8x128xf32>
    %185 = arith.addf %182, %184 : vector<8x128xf32>
    %cst_56 = arith.constant 0.000000e+00 : f32
    %186 = vector.broadcast %cst_56 : f32 to vector<8x128xf32>
    %187 = arith.maximumf %185, %186 : vector<8x128xf32>
    %188 = vector.extract_strided_slice %117 {offsets = [32, 0], sizes = [32, 128], strides = [1, 1]} : vector<64x128xbf16> to vector<32x128xbf16>
    %189 = arith.truncf %187 : vector<8x128xf32> to vector<8x128xbf16>
    %cst_57 = arith.constant dense<0.000000e+00> : vector<8x32xf32>
    %190 = tpu.matmul %189, %188, %cst_57 {dimension_numbers = #tpu.dot_dimension_numbers<[1], [1], [0], [0], [0, 0, 1, 0], [], []>} : vector<8x128xbf16>, vector<32x128xbf16>, vector<8x32xf32> -> vector<8x32xf32>
    %191 = vector.extract_strided_slice %119 {offsets = [5, 0], sizes = [1, 32], strides = [1, 1]} : vector<8x128xf32> to vector<1x32xf32>
    %192 = vector.broadcast %191 : vector<1x32xf32> to vector<8x32xf32>
    %193 = arith.addf %190, %192 : vector<8x32xf32>
    %194 = arith.addf %179, %193 : vector<8x32xf32>
    %195 = vector.extract_strided_slice %119 {offsets = [6, 0], sizes = [1, 32], strides = [1, 1]} : vector<8x128xf32> to vector<1x32xf32>
    %196 = vector.extract_strided_slice %119 {offsets = [7, 0], sizes = [1, 32], strides = [1, 1]} : vector<8x128xf32> to vector<1x32xf32>
    %cst_58 = arith.constant dense<0.000000e+00> : vector<8xf32>
    %197 = vector.multi_reduction <add>, %194, %cst_58 [1] : vector<8x32xf32> to vector<8xf32>
    %198 = vector.shape_cast %197 : vector<8xf32> to vector<8x1xf32>
    %cst_59 = arith.constant 3.200000e+01 : f32
    %199 = vector.broadcast %cst_59 : f32 to vector<8x1xf32>
    %200 = arith.divf %198, %199 : vector<8x1xf32>
    %201 = vector.broadcast %200 : vector<8x1xf32> to vector<8x32xf32>
    %202 = arith.subf %194, %201 : vector<8x32xf32>
    %203 = arith.mulf %202, %202 : vector<8x32xf32>
    %cst_60 = arith.constant dense<0.000000e+00> : vector<8xf32>
    %204 = vector.multi_reduction <add>, %203, %cst_60 [1] : vector<8x32xf32> to vector<8xf32>
    %205 = vector.shape_cast %204 : vector<8xf32> to vector<8x1xf32>
    %cst_61 = arith.constant 3.200000e+01 : f32
    %206 = vector.broadcast %cst_61 : f32 to vector<8x1xf32>
    %207 = arith.divf %205, %206 : vector<8x1xf32>
    %208 = vector.broadcast %200 : vector<8x1xf32> to vector<8x32xf32>
    %209 = arith.subf %194, %208 : vector<8x32xf32>
    %cst_62 = arith.constant 9.99999974E-6 : f32
    %210 = vector.broadcast %cst_62 : f32 to vector<8x1xf32>
    %211 = arith.addf %207, %210 : vector<8x1xf32>
    %212 = math.rsqrt %211 : vector<8x1xf32>
    %213 = vector.broadcast %212 : vector<8x1xf32> to vector<8x32xf32>
    %214 = arith.mulf %209, %213 : vector<8x32xf32>
    %215 = vector.broadcast %195 : vector<1x32xf32> to vector<8x32xf32>
    %216 = arith.mulf %214, %215 : vector<8x32xf32>
    %217 = vector.broadcast %196 : vector<1x32xf32> to vector<8x32xf32>
    %218 = arith.addf %216, %217 : vector<8x32xf32>
    %c0_63 = arith.constant 0 : index
    %c0_64 = arith.constant 0 : index
    %219 = vector.load %arg5[%c0_63, %c0_64] : memref<40x128xf32, #tpu.memory_space<vmem>>, vector<32x128xf32>
    %220 = arith.truncf %218 : vector<8x32xf32> to vector<8x32xbf16>
    %221 = arith.truncf %219 : vector<32x128xf32> to vector<32x128xbf16>
    %cst_65 = arith.constant dense<0.000000e+00> : vector<8x128xf32>
    %222 = tpu.matmul %220, %221, %cst_65 {dimension_numbers = #tpu.dot_dimension_numbers<[1], [0], [0], [1], [0, 0, 1, 1], [], []>} : vector<8x32xbf16>, vector<32x128xbf16>, vector<8x128xf32> -> vector<8x128xf32>
    %c32 = arith.constant 32 : index
    %c0_66 = arith.constant 0 : index
    %223 = vector.load %arg5[%c32, %c0_66] : memref<40x128xf32, #tpu.memory_space<vmem>>, vector<1x128xf32>
    %224 = vector.broadcast %223 : vector<1x128xf32> to vector<8x128xf32>
    %225 = arith.addf %222, %224 : vector<8x128xf32>
    %c0_67 = arith.constant 0 : index
    %c0_68 = arith.constant 0 : index
    %226 = vector.load %arg6[%c0_67, %c0_68] : memref<8x128xf32, #tpu.memory_space<vmem>>, vector<8x128xf32>
    tpu.vector_store %arg6[%c0_67, %c0_68], %225 {strides = array<i32>} : memref<8x128xf32, #tpu.memory_space<vmem>>, vector<8x128xf32>,
    return
  }
}

</mosaic_0001>

<llo_original>
// kernel: causal_transformer_forward.1
$region0: #{causal_transformer_forward.1}
  #allocation0 [shape = 'u32[]', space=smem, size = 0x4, offset = 0x4, fixed_abs, tag = 'smem constant byte address 0x4 - core index']
  #allocation1 [shape = 'u32[144,128]{1,0:T(1,128)}', space=vmem, size = 0x12000, scoped, tag = 'internal scratch']
  %s0 = inlined_call_operand.vmem [shape: f32[8,32], index: 0, kind: input, shape index: {}]
  %s1 = inlined_call_operand.vmem [shape: f32[112,128], index: 1, kind: input, shape index: {}]
  %s2 = inlined_call_operand.vmem [shape: bf16[2,32,128], index: 2, kind: input, shape index: {}]
  %s3 = inlined_call_operand.vmem [shape: bf16[2,64,128], index: 3, kind: input, shape index: {}]
  %s4 = inlined_call_operand.vmem [shape: f32[2,8,128], index: 4, kind: input, shape index: {}]
  %s5 = inlined_call_operand.vmem [shape: f32[40,128], index: 5, kind: input, shape index: {}]
  %s6 = inlined_call_operand.hbm [shape: f32[8,128], index: 6, kind: output, shape index: {}]
  %s7 = sld [smem:[#allocation0]]
  $region34: #{causal_transformer_forward.1} parent=0
    _
  %s9 = ssub.s32 1, %s7
  %s10 = scalar_select 0, %s9, %s7
  $region1: #{causal_transformer_forward.1} parent=0
    #allocation2 [shape = 'u8[4096]{0}', space=vmem, size = 0x1000, scoped, tag = 'output window, operand 0, single buffered']
    #allocation3 [shape = 's32[1]{0}', space=sflag, size = 0x4, scoped, tag = 'scoped memory for causal_transformer_forward.1']
    %11 = vsyncpa [#allocation3], 0
    // Predicated region
    $region2: #{causal_transformer_forward.1} parent=1 // pred_check
      _
    $region3: #{causal_transformer_forward.1} parent=1 // pred_check_branch
      %13 = sbr.rel (0) target = $region5
    $region4: #{causal_transformer_forward.1} parent=1 // pred_region
      _
    $region5: #{causal_transformer_forward.1} parent=1 // pred_fallthru
      _
    // Predicated region
    $region6: #{causal_transformer_forward.1} parent=1 // pred_check
      _
    $region7: #{causal_transformer_forward.1} parent=1 // pred_check_branch
      %15 = sbr.rel (0) target = $region9
    $region8: #{causal_transformer_forward.1} parent=1 // pred_region
      _
    $region9: #{causal_transformer_forward.1} parent=1 // pred_fallthru
      _
    // Predicated region
    $region10: #{causal_transformer_forward.1} parent=1 // pred_check
      _
    $region11: #{causal_transformer_forward.1} parent=1 // pred_check_branch
      %17 = sbr.rel (0) target = $region13
    $region12: #{causal_transformer_forward.1} parent=1 // pred_region
      _
    $region13: #{causal_transformer_forward.1} parent=1 // pred_fallthru
      _
    // Predicated region
    $region14: #{causal_transformer_forward.1} parent=1 // pred_check
      _
    $region15: #{causal_transformer_forward.1} parent=1 // pred_check_branch
      %19 = sbr.rel (0) target = $region17
    $region16: #{causal_transformer_forward.1} parent=1 // pred_region
      _
    $region17: #{causal_transformer_forward.1} parent=1 // pred_fallthru
      _
    // Predicated region
    $region18: #{causal_transformer_forward.1} parent=1 // pred_check
      _
    $region19: #{causal_transformer_forward.1} parent=1 // pred_check_branch
      %21 = sbr.rel (0) target = $region21
    $region20: #{causal_transformer_forward.1} parent=1 // pred_region
      _
    $region21: #{causal_transformer_forward.1} parent=1 // pred_fallthru
      _
    // Predicated region
    $region22: #{causal_transformer_forward.1} parent=1 // pred_check
      _
    $region23: #{causal_transformer_forward.1} parent=1 // pred_check_branch
      %23 = sbr.rel (0) target = $region25
    $region24: #{causal_transformer_forward.1} parent=1 // pred_region
      _
    $region25: #{causal_transformer_forward.1} parent=1 // pred_fallthru
      _
    %v25 = vld [vmem:[%s1] sm:$0xff]
    %v26 = vld [vmem:[%s1 + $0x8] sm:$0xff]
    %v27 = vld [vmem:[%s1 + $0x10] sm:$0xff]
    %v28 = vld [vmem:[%s1 + $0x18] sm:$0xff]
    %v29 = vld [vmem:[%s1 + $0x20] sm:$0xff]
    %v30 = vld [vmem:[%s1 + $0x28] sm:$0xff]
    %v31 = vpack.c.bf16 %v28, %v27
    %v32 = vpack.c.bf16 %v30, %v29
    %v33 = vld [vmem:[%s1 + $0x30] sm:$0xff]
    %v34 = vld [vmem:[%s1 + $0x38] sm:$0xff]
    %v35 = vld [vmem:[%s1 + $0x40] sm:$0xff]
    %v36 = vld [vmem:[%s1 + $0x48] sm:$0xff]
    %v37 = vpack.c.bf16 %v34, %v33
    %v38 = vpack.c.bf16 %v36, %v35
    %v39 = vld [vmem:[%s1 + $0x50] sm:$0xff]
    %v40 = vld [vmem:[%s1 + $0x58] sm:$0xff]
    %v41 = vld [vmem:[%s1 + $0x60] sm:$0xff]
    %v42 = vld [vmem:[%s1 + $0x68] sm:$0xff]
    %v43 = vld [vmem:[%s0] sm:$0xff]
    %v44 = vadd.f32 %v43, %v25
    %v45 = vld [vmem:[%s2] sm:$0xf]
    %v46 = vld [vmem:[%s2 + $0x4] sm:$0xf]
    %v47 = vld [vmem:[%s2 + $0x8] sm:$0xf]
    %v48 = vld [vmem:[%s2 + $0xc] sm:$0xf]
    %v49 = vld [vmem:[%s3] sm:$0xf]
    %v50 = vld [vmem:[%s3 + $0x4] sm:$0xf]
    %v51 = vld [vmem:[%s3 + $0x8] sm:$0xf]
    %v52 = vld [vmem:[%s3 + $0xc] sm:$0xf]
    %v53 = vld [vmem:[%s3 + $0x10] sm:$0xf]
    %v54 = vld [vmem:[%s3 + $0x14] sm:$0xf]
    %v55 = vld [vmem:[%s3 + $0x18] sm:$0xf]
    %v56 = vld [vmem:[%s3 + $0x1c] sm:$0xf]
    %v57 = vld [vmem:[%s4] sm:$0xff]
    %v58 = vpack.c.bf16 %v44, %v44
    %v59 = vlaneseq
    %v60 = vshrl.u32 %v59, 7
    %v61 = vsub.s32 0, %v60
    %v62 = vrot.slane %v57, %v61
    %v67 = vunpack.c.l.b16 %v45
    %v68 = vunpack.c.l.b16 %v46
    %v69 = vunpack.c.l.b16 %v47
    %v70 = vunpack.c.l.b16 %v48
    %v71 = vpack.c.b16 %v68, %v67
    %v72 = vpack.c.b16 %v70, %v69
    %vm75 = vcmask 261120
    %v77 = vsel %vm75, %v58, 0
    %79 = vmatprep.subr.bf16.mxu0 0
    %80 = vmatpush1.bf16.msra.mxu0 %v71
    %81 = vmatprep.subr.bf16.mxu0 0
    %82 = vmatpush1.bf16.msra.mxu0 %v72
    %83 = vmatprep.subr.bf16.mxu0 0
    %84 = vmatpush1.bf16.msra.mxu0 0
    %85 = vmatprep.subr.bf16.mxu0 0
    %86 = vmatpush1.bf16.msra.mxu0 0
    %87 = vmatprep.subr.bf16.mxu0 0
    %88 = vmatpush1.bf16.msra.mxu0 0
    %89 = vmatprep.subr.bf16.mxu0 0
    %90 = vmatpush1.bf16.msra.mxu0 0
    %91 = vmatprep.subr.bf16.mxu0 0
    %92 = vmatpush1.bf16.msra.mxu0 0
    %93 = vmatprep.subr.bf16.mxu0 0
    %94 = vmatpush1.bf16.msra.mxu0 0
    %95 = vmatprep.subr.bf16.mxu0 0
    %96 = vmatpush1.bf16.msra.mxu0 0
    %97 = vmatprep.subr.bf16.mxu0 0
    %98 = vmatpush1.bf16.msra.mxu0 0
    %99 = vmatprep.subr.bf16.mxu0 0
    %100 = vmatpush1.bf16.msra.mxu0 0
    %101 = vmatprep.subr.bf16.mxu0 0
    %102 = vmatpush1.bf16.msra.mxu0 0
    %103 = vmatprep.subr.bf16.mxu0 0
    %104 = vmatpush1.bf16.msra.mxu0 0
    %105 = vmatprep.subr.bf16.mxu0 0
    %106 = vmatpush1.bf16.msra.mxu0 0
    %107 = vmatprep.subr.bf16.mxu0 0
    %108 = vmatpush1.bf16.msra.mxu0 0
    %109 = vmatprep.subr.bf16.mxu0 0
    %110 = vmatpush1.bf16.msra.mxu0 0
    %111 = vmatprep.mubr.bf16.mxu0 0
    %112 = vmatmul.mubr.bf16.gmra.mrb[0].mxu0 %v77
    %v113 = vpop.f32.mrb[0].mxu0
    %v114 = vadd.f32 %v62, %v113
    %v115 = vpop.f32.mrb[0].mxu0
    %v116 = vpop.f32.mrb[0].mxu0
    %v117 = vpop.f32.mrb[0].mxu0
    %118 = vdwg.mxu0
    %v119 = vpack.c.bf16 %v114, %v114
    %121 = vrot.lane.b32.xlu0 %v119, 96
    %v122 = vpop.permute.xlu0 %121
    %vm123 = vcmask 64512
    %v125 = vsel %vm123, %v31, 0
    %v128 = vsel %vm123, %v32, 0
    %vm130 = vcmask 1043456
    %v132 = vsel %vm130, %v122, 0
    %134 = vmatprep.subr.bf16.mxu0 0
    %135 = vmatpush1.bf16.msra.mxu0 %v132
    %136 = vmatprep.subr.bf16.mxu0 0
    %137 = vmatpush1.bf16.msra.mxu0 0
    %138 = vmatprep.subr.bf16.mxu0 0
    %139 = vmatpush1.bf16.msra.mxu0 0
    %140 = vmatprep.subr.bf16.mxu0 0
    %141 = vmatpush1.bf16.msra.mxu0 0
    %142 = vmatprep.subr.bf16.mxu0 0
    %143 = vmatpush1.bf16.msra.mxu0 0
    %144 = vmatprep.subr.bf16.mxu0 0
    %145 = vmatpush1.bf16.msra.mxu0 0
    %146 = vmatprep.subr.bf16.mxu0 0
    %147 = vmatpush1.bf16.msra.mxu0 0
    %148 = vmatprep.subr.bf16.mxu0 0
    %149 = vmatpush1.bf16.msra.mxu0 0
    %150 = vmatprep.subr.bf16.mxu0 0
    %151 = vmatpush1.bf16.msra.mxu0 0
    %152 = vmatprep.subr.bf16.mxu0 0
    %153 = vmatpush1.bf16.msra.mxu0 0
    %154 = vmatprep.subr.bf16.mxu0 0
    %155 = vmatpush1.bf16.msra.mxu0 0
    %156 = vmatprep.subr.bf16.mxu0 0
    %157 = vmatpush1.bf16.msra.mxu0 0
    %158 = vmatprep.subr.bf16.mxu0 0
    %159 = vmatpush1.bf16.msra.mxu0 0
    %160 = vmatprep.subr.bf16.mxu0 0
    %161 = vmatpush1.bf16.msra.mxu0 0
    %162 = vmatprep.subr.bf16.mxu0 0
    %163 = vmatpush1.bf16.msra.mxu0 0
    %164 = vmatprep.subr.bf16.mxu0 0
    %165 = vmatpush1.bf16.msra.mxu0 0
    %166 = vmatprep.mubr.bf16.mxu0 0
    %167 = vmatmul.mubr.bf16.gmra.mrb[0].mxu0 %v125
    %v168 = vpop.f32.mrb[0].mxu0
    %v169 = vadd.f32 0.0, %v168
    %v170 = vpop.f32.mrb[0].mxu0
    %v171 = vpop.f32.mrb[0].mxu0
    %v172 = vadd.f32 0.0, %v171
    %v173 = vpop.f32.mrb[0].mxu0
    %174 = vmatprep.mubr.bf16.mxu0 0
    %175 = vmatmul.mubr.bf16.gmra.mrb[0].mxu0 %v128
    %v176 = vpop.f32.mrb[0].mxu0
    %v177 = vadd.f32 0.0, %v176
    %v178 = vpop.f32.mrb[0].mxu0
    %v179 = vpop.f32.mrb[0].mxu0
    %v180 = vadd.f32 0.0, %v179
    %v181 = vpop.f32.mrb[0].mxu0
    %182 = vdwg.mxu0
    %v183 = vmul.f32 %v169, %v39
    %v184 = vmul.f32 %v172, %v40
    %v185 = vmul.f32 %v177, %v41
    %v186 = vmul.f32 %v180, %v42
    %v187 = vpack.c.bf16 %v184, %v183
    %v188 = vpack.c.bf16 %v186, %v185
    %v190 = vsel %vm75, %v119, 0
    %v193 = vsel %vm75, %v187, 0
    %v196 = vsel %vm75, %v188, 0
    %198 = vmatprep.subr.bf16.mxu0 0
    %199 = vmatpush1.bf16.xpose.msra.mxu0 %v193
    %200 = vmatprep.subr.bf16.mxu0 0
    %201 = vmatpush1.bf16.xpose.msra.mxu0 %v196
    %202 = vmatprep.subr.bf16.mxu0 0
    %203 = vmatpush1.bf16.xpose.msra.mxu0 0
    %204 = vmatprep.subr.bf16.mxu0 0
    %205 = vmatpush1.bf16.xpose.msra.mxu0 0
    %206 = vmatprep.subr.bf16.mxu0 0
    %207 = vmatpush1.bf16.xpose.msra.mxu0 0
    %208 = vmatprep.subr.bf16.mxu0 0
    %209 = vmatpush1.bf16.xpose.msra.mxu0 0
    %210 = vmatprep.subr.bf16.mxu0 0
    %211 = vmatpush1.bf16.xpose.msra.mxu0 0
    %212 = vmatprep.subr.bf16.mxu0 0
    %213 = vmatpush1.bf16.xpose.msra.mxu0 0
    %214 = vmatprep.subr.bf16.mxu0 0
    %215 = vmatpush1.bf16.xpose.msra.mxu0 0
    %216 = vmatprep.subr.bf16.mxu0 0
    %217 = vmatpush1.bf16.xpose.msra.mxu0 0
    %218 = vmatprep.subr.bf16.mxu0 0
    %219 = vmatpush1.bf16.xpose.msra.mxu0 0
    %220 = vmatprep.subr.bf16.mxu0 0
    %221 = vmatpush1.bf16.xpose.msra.mxu0 0
    %222 = vmatprep.subr.bf16.mxu0 0
    %223 = vmatpush1.bf16.xpose.msra.mxu0 0
    %224 = vmatprep.subr.bf16.mxu0 0
    %225 = vmatpush1.bf16.xpose.msra.mxu0 0
    %226 = vmatprep.subr.bf16.mxu0 0
    %227 = vmatpush1.bf16.xpose.msra.mxu0 0
    %228 = vmatprep.subr.bf16.mxu0 0
    %229 = vmatpush1.bf16.xpose.msra.mxu0 0
    %230 = vmatprep.mubr.bf16.mxu0 0
    %231 = vmatmul.mubr.bf16.gmra.mrb[0].mxu0 %v190
    %v232 = vpop.f32.mrb[0].mxu0
    %v233 = vadd.f32 %v26, %v232
    %v234 = vpop.f32.mrb[0].mxu0
    %v235 = vpop.f32.mrb[0].mxu0
    %v236 = vpop.f32.mrb[0].mxu0
    %237 = vdwg.mxu0
    %v238 = vsel %vm75, %v233, -inf
    %239 = vmax.xlane.f32.xlu0 %v238
    %v240 = vpop.xlane.xlu0 %239
    %v241 = vsub.f32 %v233, %v240
    %v242 = vmul.f32 %v241, 1.442695
    %v243 = vpow.pop %v242
    %v244 = vpack.c.bf16 %v243, %v243
    %v246 = vsel %vm75, %v244, 0
    %248 = vmatprep.subr.bf16.mxu0 0
    %249 = vmatpush1.bf16.msra.mxu0 %v37
    %250 = vmatprep.subr.bf16.mxu0 0
    %251 = vmatpush1.bf16.msra.mxu0 %v38
    %252 = vmatprep.subr.bf16.mxu0 0
    %253 = vmatpush1.bf16.msra.mxu0 0
    %254 = vmatprep.subr.bf16.mxu0 0
    %255 = vmatpush1.bf16.msra.mxu0 0
    %256 = vmatprep.subr.bf16.mxu0 0
    %257 = vmatpush1.bf16.msra.mxu0 0
    %258 = vmatprep.subr.bf16.mxu0 0
    %259 = vmatpush1.bf16.msra.mxu0 0
    %260 = vmatprep.subr.bf16.mxu0 0
    %261 = vmatpush1.bf16.msra.mxu0 0
    %262 = vmatprep.subr.bf16.mxu0 0
    %263 = vmatpush1.bf16.msra.mxu0 0
    %264 = vmatprep.subr.bf16.mxu0 0
    %265 = vmatpush1.bf16.msra.mxu0 0
    %266 = vmatprep.subr.bf16.mxu0 0
    %267 = vmatpush1.bf16.msra.mxu0 0
    %268 = vmatprep.subr.bf16.mxu0 0
    %269 = vmatpush1.bf16.msra.mxu0 0
    %270 = vmatprep.subr.bf16.mxu0 0
    %271 = vmatpush1.bf16.msra.mxu0 0
    %272 = vmatprep.subr.bf16.mxu0 0
    %273 = vmatpush1.bf16.msra.mxu0 0
    %274 = vmatprep.subr.bf16.mxu0 0
    %275 = vmatpush1.bf16.msra.mxu0 0
    %276 = vmatprep.subr.bf16.mxu0 0
    %277 = vmatpush1.bf16.msra.mxu0 0
    %278 = vmatprep.subr.bf16.mxu0 0
    %279 = vmatpush1.bf16.msra.mxu0 0
    %280 = vmatprep.mubr.bf16.mxu0 0
    %281 = vmatmul.mubr.bf16.gmra.mrb[0].mxu0 %v246
    %v282 = vpop.f32.mrb[0].mxu0
    %v283 = vadd.f32 0.0, %v282
    %v284 = vpop.f32.mrb[0].mxu0
    %v285 = vpop.f32.mrb[0].mxu0
    %v286 = vpop.f32.mrb[0].mxu0
    %287 = vdwg.mxu0
    %v288 = vrcp.pop %v283
    %v289 = vmul.f32 %v243, %v288
    %v290 = vpack.c.bf16 %v289, %v289
    %293 = vrot.lane.b32.xlu0 %v187, 96
    %v294 = vpop.permute.xlu0 %293
    %295 = vrot.lane.b32.xlu0 %v188, 96
    %v296 = vpop.permute.xlu0 %295
    %v300 = vsel %vm75, %v290, 0
    %302 = vmatprep.subr.bf16.mxu0 0
    %303 = vmatpush1.bf16.msra.mxu0 %v294
    %304 = vmatprep.subr.bf16.mxu0 0
    %305 = vmatpush1.bf16.msra.mxu0 %v296
    %306 = vmatprep.subr.bf16.mxu0 0
    %307 = vmatpush1.bf16.msra.mxu0 0
    %308 = vmatprep.subr.bf16.mxu0 0
    %309 = vmatpush1.bf16.msra.mxu0 0
    %310 = vmatprep.subr.bf16.mxu0 0
    %311 = vmatpush1.bf16.msra.mxu0 0
    %312 = vmatprep.subr.bf16.mxu0 0
    %313 = vmatpush1.bf16.msra.mxu0 0
    %314 = vmatprep.subr.bf16.mxu0 0
    %315 = vmatpush1.bf16.msra.mxu0 0
    %316 = vmatprep.subr.bf16.mxu0 0
    %317 = vmatpush1.bf16.msra.mxu0 0
    %318 = vmatprep.subr.bf16.mxu0 0
    %319 = vmatpush1.bf16.msra.mxu0 0
    %320 = vmatprep.subr.bf16.mxu0 0
    %321 = vmatpush1.bf16.msra.mxu0 0
    %322 = vmatprep.subr.bf16.mxu0 0
    %323 = vmatpush1.bf16.msra.mxu0 0
    %324 = vmatprep.subr.bf16.mxu0 0
    %325 = vmatpush1.bf16.msra.mxu0 0
    %326 = vmatprep.subr.bf16.mxu0 0
    %327 = vmatpush1.bf16.msra.mxu0 0
    %328 = vmatprep.subr.bf16.mxu0 0
    %329 = vmatpush1.bf16.msra.mxu0 0
    %330 = vmatprep.subr.bf16.mxu0 0
    %331 = vmatpush1.bf16.msra.mxu0 0
    %332 = vmatprep.subr.bf16.mxu0 0
    %333 = vmatpush1.bf16.msra.mxu0 0
    %334 = vmatprep.mubr.bf16.mxu0 0
    %335 = vmatmul.mubr.bf16.gmra.mrb[0].mxu0 %v300
    %v336 = vpop.f32.mrb[0].mxu0
    %v337 = vadd.f32 0.0, %v336
    %v338 = vpop.f32.mrb[0].mxu0
    %v339 = vpop.f32.mrb[0].mxu0
    %v340 = vpop.f32.mrb[0].mxu0
    %341 = vdwg.mxu0
    %v342 = vpack.c.bf16 %v337, %v337
    %v343 = vlaneseq
    %v344 = vshrl.u32 %v343, 7
    %v345 = vsub.s32 1, %v344
    %v346 = vrot.slane %v57, %v345
    %347 = vrot.lane.b32.xlu0 %v71, 32
    %v348 = vpop.permute.xlu0 %347
    %349 = vrot.lane.b32.xlu0 %v72, 32
    %v350 = vpop.permute.xlu0 %349
    %v354 = vsel %vm75, %v342, 0
    %356 = vmatprep.subr.bf16.mxu0 0
    %357 = vmatpush1.bf16.msra.mxu0 %v348
    %358 = vmatprep.subr.bf16.mxu0 0
    %359 = vmatpush1.bf16.msra.mxu0 %v350
    %360 = vmatprep.subr.bf16.mxu0 0
    %361 = vmatpush1.bf16.msra.mxu0 0
    %362 = vmatprep.subr.bf16.mxu0 0
    %363 = vmatpush1.bf16.msra.mxu0 0
    %364 = vmatprep.subr.bf16.mxu0 0
    %365 = vmatpush1.bf16.msra.mxu0 0
    %366 = vmatprep.subr.bf16.mxu0 0
    %367 = vmatpush1.bf16.msra.mxu0 0
    %368 = vmatprep.subr.bf16.mxu0 0
    %369 = vmatpush1.bf16.msra.mxu0 0
    %370 = vmatprep.subr.bf16.mxu0 0
    %371 = vmatpush1.bf16.msra.mxu0 0
    %372 = vmatprep.subr.bf16.mxu0 0
    %373 = vmatpush1.bf16.msra.mxu0 0
    %374 = vmatprep.subr.bf16.mxu0 0
    %375 = vmatpush1.bf16.msra.mxu0 0
    %376 = vmatprep.subr.bf16.mxu0 0
    %377 = vmatpush1.bf16.msra.mxu0 0
    %378 = vmatprep.subr.bf16.mxu0 0
    %379 = vmatpush1.bf16.msra.mxu0 0
    %380 = vmatprep.subr.bf16.mxu0 0
    %381 = vmatpush1.bf16.msra.mxu0 0
    %382 = vmatprep.subr.bf16.mxu0 0
    %383 = vmatpush1.bf16.msra.mxu0 0
    %384 = vmatprep.subr.bf16.mxu0 0
    %385 = vmatpush1.bf16.msra.mxu0 0
    %386 = vmatprep.subr.bf16.mxu0 0
    %387 = vmatpush1.bf16.msra.mxu0 0
    %388 = vmatprep.mubr.bf16.mxu0 0
    %389 = vmatmul.mubr.bf16.gmra.mrb[0].mxu0 %v354
    %v390 = vpop.f32.mrb[0].mxu0
    %v391 = vadd.f32 %v346, %v390
    %v392 = vpop.f32.mrb[0].mxu0
    %v393 = vpop.f32.mrb[0].mxu0
    %v394 = vpop.f32.mrb[0].mxu0
    %395 = vdwg.mxu0
    %v396 = vadd.f32 %v44, %v391
    %v397 = vsel %vm75, %v396, 0.0
    %398 = vadd.xlane.f32.xlu0 %v397
    %v399 = vpop.xlane.xlu0 %398
    %v400 = vrcp.pop 32.0
    %v401 = vmul.f32 %v399, %v400
    %v402 = vsub.f32 %v396, %v401
    %v403 = vmul.f32 %v402, %v402
    %v404 = vsel %vm75, %v403, 0.0
    %405 = vadd.xlane.f32.xlu0 %v404
    %v406 = vpop.xlane.xlu0 %405
    %v407 = vmul.f32 %v406, %v400
    %v408 = vadd.f32 %v407, 1e-05
    %v409 = vrsqrt.pop %v408
    %v410 = vmul.f32 %v402, %v409
    %v411 = vlaneseq
    %v412 = vshrl.u32 %v411, 7
    %v413 = vsub.s32 2, %v412
    %v414 = vrot.slane %v57, %v413
    %v415 = vmul.f32 %v410, %v414
    %v416 = vlaneseq
    %v417 = vshrl.u32 %v416, 7
    %v418 = vsub.s32 3, %v417
    %v419 = vrot.slane %v57, %v418
    %v420 = vadd.f32 %v415, %v419
    %v421 = vpack.c.bf16 %v420, %v420
    %v422 = vlaneseq
    %v423 = vshrl.u32 %v422, 7
    %v424 = vsub.s32 4, %v423
    %v425 = vrot.slane %v57, %v424
    %v430 = vunpack.c.l.b16 %v49
    %v431 = vunpack.c.l.b16 %v50
    %v432 = vunpack.c.l.b16 %v51
    %v433 = vunpack.c.l.b16 %v52
    %v434 = vpack.c.b16 %v431, %v430
    %v435 = vpack.c.b16 %v433, %v432
    %v439 = vsel %vm75, %v421, 0
    %441 = vmatprep.subr.bf16.mxu0 0
    %442 = vmatpush1.bf16.msra.mxu0 %v434
    %443 = vmatprep.subr.bf16.mxu0 0
    %444 = vmatpush1.bf16.msra.mxu0 %v435
    %445 = vmatprep.subr.bf16.mxu0 0
    %446 = vmatpush1.bf16.msra.mxu0 0
    %447 = vmatprep.subr.bf16.mxu0 0
    %448 = vmatpush1.bf16.msra.mxu0 0
    %449 = vmatprep.subr.bf16.mxu0 0
    %450 = vmatpush1.bf16.msra.mxu0 0
    %451 = vmatprep.subr.bf16.mxu0 0
    %452 = vmatpush1.bf16.msra.mxu0 0
    %453 = vmatprep.subr.bf16.mxu0 0
    %454 = vmatpush1.bf16.msra.mxu0 0
    %455 = vmatprep.subr.bf16.mxu0 0
    %456 = vmatpush1.bf16.msra.mxu0 0
    %457 = vmatprep.subr.bf16.mxu0 0
    %458 = vmatpush1.bf16.msra.mxu0 0
    %459 = vmatprep.subr.bf16.mxu0 0
    %460 = vmatpush1.bf16.msra.mxu0 0
    %461 = vmatprep.subr.bf16.mxu0 0
    %462 = vmatpush1.bf16.msra.mxu0 0
    %463 = vmatprep.subr.bf16.mxu0 0
    %464 = vmatpush1.bf16.msra.mxu0 0
    %465 = vmatprep.subr.bf16.mxu0 0
    %466 = vmatpush1.bf16.msra.mxu0 0
    %467 = vmatprep.subr.bf16.mxu0 0
    %468 = vmatpush1.bf16.msra.mxu0 0
    %469 = vmatprep.subr.bf16.mxu0 0
    %470 = vmatpush1.bf16.msra.mxu0 0
    %471 = vmatprep.subr.bf16.mxu0 0
    %472 = vmatpush1.bf16.msra.mxu0 0
    %473 = vmatprep.mubr.bf16.mxu0 0
    %474 = vmatmul.mubr.bf16.gmra.mrb[0].mxu0 %v439
    %v475 = vpop.f32.mrb[0].mxu0
    %v476 = vadd.f32 %v425, %v475
    %v477 = vpop.f32.mrb[0].mxu0
    %v478 = vpop.f32.mrb[0].mxu0
    %v479 = vpop.f32.mrb[0].mxu0
    %480 = vdwg.mxu0
    %v481 = vmax.f32 %v476, 0.0
    %v482 = vpack.c.bf16 %v481, %v481
    %v483 = vlaneseq
    %v484 = vshrl.u32 %v483, 7
    %v485 = vsub.s32 5, %v484
    %v486 = vrot.slane %v57, %v485
    %v491 = vunpack.c.l.b16 %v53
    %v492 = vunpack.c.l.b16 %v54
    %v493 = vunpack.c.l.b16 %v55
    %v494 = vunpack.c.l.b16 %v56
    %v495 = vpack.c.b16 %v492, %v491
    %v496 = vpack.c.b16 %v494, %v493
    %499 = vmatprep.subr.bf16.mxu0 0
    %500 = vmatpush1.bf16.xpose.msra.mxu0 %v495
    %501 = vmatprep.subr.bf16.mxu0 0
    %502 = vmatpush1.bf16.xpose.msra.mxu0 %v496
    %503 = vmatprep.subr.bf16.mxu0 0
    %504 = vmatpush1.bf16.xpose.msra.mxu0 0
    %505 = vmatprep.subr.bf16.mxu0 0
    %506 = vmatpush1.bf16.xpose.msra.mxu0 0
    %507 = vmatprep.subr.bf16.mxu0 0
    %508 = vmatpush1.bf16.xpose.msra.mxu0 0
    %509 = vmatprep.subr.bf16.mxu0 0
    %510 = vmatpush1.bf16.xpose.msra.mxu0 0
    %511 = vmatprep.subr.bf16.mxu0 0
    %512 = vmatpush1.bf16.xpose.msra.mxu0 0
    %513 = vmatprep.subr.bf16.mxu0 0
    %514 = vmatpush1.bf16.xpose.msra.mxu0 0
    %515 = vmatprep.subr.bf16.mxu0 0
    %516 = vmatpush1.bf16.xpose.msra.mxu0 0
    %517 = vmatprep.subr.bf16.mxu0 0
    %518 = vmatpush1.bf16.xpose.msra.mxu0 0
    %519 = vmatprep.subr.bf16.mxu0 0
    %520 = vmatpush1.bf16.xpose.msra.mxu0 0
    %521 = vmatprep.subr.bf16.mxu0 0
    %522 = vmatpush1.bf16.xpose.msra.mxu0 0
    %523 = vmatprep.subr.bf16.mxu0 0
    %524 = vmatpush1.bf16.xpose.msra.mxu0 0
    %525 = vmatprep.subr.bf16.mxu0 0
    %526 = vmatpush1.bf16.xpose.msra.mxu0 0
    %527 = vmatprep.subr.bf16.mxu0 0
    %528 = vmatpush1.bf16.xpose.msra.mxu0 0
    %529 = vmatprep.subr.bf16.mxu0 0
    %530 = vmatpush1.bf16.xpose.msra.mxu0 0
    %531 = vmatprep.mubr.bf16.mxu0 0
    %532 = vmatmul.mubr.bf16.gmra.mrb[0].mxu0 %v482
    %v533 = vpop.f32.mrb[0].mxu0
    %v534 = vadd.f32 %v486, %v533
    %v535 = vpop.f32.mrb[0].mxu0
    %v536 = vpop.f32.mrb[0].mxu0
    %v537 = vpop.f32.mrb[0].mxu0
    %538 = vdwg.mxu0
    %v539 = vadd.f32 %v420, %v534
    %v540 = vsel %vm75, %v539, 0.0
    %541 = vadd.xlane.f32.xlu0 %v540
    %v542 = vpop.xlane.xlu0 %541
    %v543 = vmul.f32 %v542, %v400
    %v544 = vsub.f32 %v539, %v543
    %v545 = vmul.f32 %v544, %v544
    %v546 = vsel %vm75, %v545, 0.0
    %547 = vadd.xlane.f32.xlu0 %v546
    %v548 = vpop.xlane.xlu0 %547
    %v549 = vmul.f32 %v548, %v400
    %v550 = vadd.f32 %v549, 1e-05
    %v551 = vrsqrt.pop %v550
    %v552 = vmul.f32 %v544, %v551
    %v553 = vlaneseq
    %v554 = vshrl.u32 %v553, 7
    %v555 = vsub.s32 6, %v554
    %v556 = vrot.slane %v57, %v555
    %v557 = vmul.f32 %v552, %v556
    %v558 = vlaneseq
    %v559 = vshrl.u32 %v558, 7
    %v560 = vsub.s32 7, %v559
    %v561 = vrot.slane %v57, %v560
    %v562 = vadd.f32 %v557, %v561
    %s563 = scalar_lea.vmem %s2, 16
    %v564 = vld [vmem:[%s563] sm:$0xf]
    %v565 = vld [vmem:[%s563 + $0x4] sm:$0xf]
    %v566 = vld [vmem:[%s563 + $0x8] sm:$0xf]
    %v567 = vld [vmem:[%s563 + $0xc] sm:$0xf]
    %s568 = scalar_lea.vmem %s3, 32
    %v569 = vld [vmem:[%s568] sm:$0xf]
    %v570 = vld [vmem:[%s568 + $0x4] sm:$0xf]
    %v571 = vld [vmem:[%s568 + $0x8] sm:$0xf]
    %v572 = vld [vmem:[%s568 + $0xc] sm:$0xf]
    %v573 = vld [vmem:[%s568 + $0x10] sm:$0xf]
    %v574 = vld [vmem:[%s568 + $0x14] sm:$0xf]
    %v575 = vld [vmem:[%s568 + $0x18] sm:$0xf]
    %v576 = vld [vmem:[%s568 + $0x1c] sm:$0xf]
    %s577 = scalar_lea.vmem %s4, 8
    %v578 = vld [vmem:[%s577] sm:$0xff]
    %v579 = vpack.c.bf16 %v562, %v562
    %v580 = vlaneseq
    %v581 = vshrl.u32 %v580, 7
    %v582 = vsub.s32 0, %v581
    %v583 = vrot.slane %v578, %v582
    %v588 = vunpack.c.l.b16 %v564
    %v589 = vunpack.c.l.b16 %v565
    %v590 = vunpack.c.l.b16 %v566
    %v591 = vunpack.c.l.b16 %v567
    %v592 = vpack.c.b16 %v589, %v588
    %v593 = vpack.c.b16 %v591, %v590
    %v597 = vsel %vm75, %v579, 0
    %599 = vmatprep.subr.bf16.mxu0 0
    %600 = vmatpush1.bf16.msra.mxu0 %v592
    %601 = vmatprep.subr.bf16.mxu0 0
    %602 = vmatpush1.bf16.msra.mxu0 %v593
    %603 = vmatprep.subr.bf16.mxu0 0
    %604 = vmatpush1.bf16.msra.mxu0 0
    %605 = vmatprep.subr.bf16.mxu0 0
    %606 = vmatpush1.bf16.msra.mxu0 0
    %607 = vmatprep.subr.bf16.mxu0 0
    %608 = vmatpush1.bf16.msra.mxu0 0
    %609 = vmatprep.subr.bf16.mxu0 0
    %610 = vmatpush1.bf16.msra.mxu0 0
    %611 = vmatprep.subr.bf16.mxu0 0
    %612 = vmatpush1.bf16.msra.mxu0 0
    %613 = vmatprep.subr.bf16.mxu0 0
    %614 = vmatpush1.bf16.msra.mxu0 0
    %615 = vmatprep.subr.bf16.mxu0 0
    %616 = vmatpush1.bf16.msra.mxu0 0
    %617 = vmatprep.subr.bf16.mxu0 0
    %618 = vmatpush1.bf16.msra.mxu0 0
    %619 = vmatprep.subr.bf16.mxu0 0
    %620 = vmatpush1.bf16.msra.mxu0 0
    %621 = vmatprep.subr.bf16.mxu0 0
    %622 = vmatpush1.bf16.msra.mxu0 0
    %623 = vmatprep.subr.bf16.mxu0 0
    %624 = vmatpush1.bf16.msra.mxu0 0
    %625 = vmatprep.subr.bf16.mxu0 0
    %626 = vmatpush1.bf16.msra.mxu0 0
    %627 = vmatprep.subr.bf16.mxu0 0
    %628 = vmatpush1.bf16.msra.mxu0 0
    %629 = vmatprep.subr.bf16.mxu0 0
    %630 = vmatpush1.bf16.msra.mxu0 0
    %631 = vmatprep.mubr.bf16.mxu0 0
    %632 = vmatmul.mubr.bf16.gmra.mrb[0].mxu0 %v597
    %v633 = vpop.f32.mrb[0].mxu0
    %v634 = vadd.f32 %v583, %v633
    %v635 = vpop.f32.mrb[0].mxu0
    %v636 = vpop.f32.mrb[0].mxu0
    %v637 = vpop.f32.mrb[0].mxu0
    %638 = vdwg.mxu0
    %v639 = vpack.c.bf16 %v634, %v634
    %641 = vrot.lane.b32.xlu0 %v639, 96
    %v642 = vpop.permute.xlu0 %641
    %v644 = vsel %vm130, %v642, 0
    %646 = vmatprep.subr.bf16.mxu0 0
    %647 = vmatpush1.bf16.msra.mxu0 %v644
    %648 = vmatprep.subr.bf16.mxu0 0
    %649 = vmatpush1.bf16.msra.mxu0 0
    %650 = vmatprep.subr.bf16.mxu0 0
    %651 = vmatpush1.bf16.msra.mxu0 0
    %652 = vmatprep.subr.bf16.mxu0 0
    %653 = vmatpush1.bf16.msra.mxu0 0
    %654 = vmatprep.subr.bf16.mxu0 0
    %655 = vmatpush1.bf16.msra.mxu0 0
    %656 = vmatprep.subr.bf16.mxu0 0
    %657 = vmatpush1.bf16.msra.mxu0 0
    %658 = vmatprep.subr.bf16.mxu0 0
    %659 = vmatpush1.bf16.msra.mxu0 0
    %660 = vmatprep.subr.bf16.mxu0 0
    %661 = vmatpush1.bf16.msra.mxu0 0
    %662 = vmatprep.subr.bf16.mxu0 0
    %663 = vmatpush1.bf16.msra.mxu0 0
    %664 = vmatprep.subr.bf16.mxu0 0
    %665 = vmatpush1.bf16.msra.mxu0 0
    %666 = vmatprep.subr.bf16.mxu0 0
    %667 = vmatpush1.bf16.msra.mxu0 0
    %668 = vmatprep.subr.bf16.mxu0 0
    %669 = vmatpush1.bf16.msra.mxu0 0
    %670 = vmatprep.subr.bf16.mxu0 0
    %671 = vmatpush1.bf16.msra.mxu0 0
    %672 = vmatprep.subr.bf16.mxu0 0
    %673 = vmatpush1.bf16.msra.mxu0 0
    %674 = vmatprep.subr.bf16.mxu0 0
    %675 = vmatpush1.bf16.msra.mxu0 0
    %676 = vmatprep.subr.bf16.mxu0 0
    %677 = vmatpush1.bf16.msra.mxu0 0
    %678 = vmatprep.mubr.bf16.mxu0 0
    %679 = vmatmul.mubr.bf16.gmra.mrb[0].mxu0 %v125
    %v680 = vpop.f32.mrb[0].mxu0
    %v681 = vadd.f32 0.0, %v680
    %v682 = vpop.f32.mrb[0].mxu0
    %v683 = vpop.f32.mrb[0].mxu0
    %v684 = vadd.f32 0.0, %v683
    %v685 = vpop.f32.mrb[0].mxu0
    %686 = vmatprep.mubr.bf16.mxu0 0
    %687 = vmatmul.mubr.bf16.gmra.mrb[0].mxu0 %v128
    %v688 = vpop.f32.mrb[0].mxu0
    %v689 = vadd.f32 0.0, %v688
    %v690 = vpop.f32.mrb[0].mxu0
    %v691 = vpop.f32.mrb[0].mxu0
    %v692 = vadd.f32 0.0, %v691
    %v693 = vpop.f32.mrb[0].mxu0
    %694 = vdwg.mxu0
    %v695 = vmul.f32 %v681, %v39
    %v696 = vmul.f32 %v684, %v40
    %v697 = vmul.f32 %v689, %v41
    %v698 = vmul.f32 %v692, %v42
    %v699 = vpack.c.bf16 %v696, %v695
    %v700 = vpack.c.bf16 %v698, %v697
    %v702 = vsel %vm75, %v639, 0
    %v705 = vsel %vm75, %v699, 0
    %v708 = vsel %vm75, %v700, 0
    %710 = vmatprep.subr.bf16.mxu0 0
    %711 = vmatpush1.bf16.xpose.msra.mxu0 %v705
    %712 = vmatprep.subr.bf16.mxu0 0
    %713 = vmatpush1.bf16.xpose.msra.mxu0 %v708
    %714 = vmatprep.subr.bf16.mxu0 0
    %715 = vmatpush1.bf16.xpose.msra.mxu0 0
    %716 = vmatprep.subr.bf16.mxu0 0
    %717 = vmatpush1.bf16.xpose.msra.mxu0 0
    %718 = vmatprep.subr.bf16.mxu0 0
    %719 = vmatpush1.bf16.xpose.msra.mxu0 0
    %720 = vmatprep.subr.bf16.mxu0 0
    %721 = vmatpush1.bf16.xpose.msra.mxu0 0
    %722 = vmatprep.subr.bf16.mxu0 0
    %723 = vmatpush1.bf16.xpose.msra.mxu0 0
    %724 = vmatprep.subr.bf16.mxu0 0
    %725 = vmatpush1.bf16.xpose.msra.mxu0 0
    %726 = vmatprep.subr.bf16.mxu0 0
    %727 = vmatpush1.bf16.xpose.msra.mxu0 0
    %728 = vmatprep.subr.bf16.mxu0 0
    %729 = vmatpush1.bf16.xpose.msra.mxu0 0
    %730 = vmatprep.subr.bf16.mxu0 0
    %731 = vmatpush1.bf16.xpose.msra.mxu0 0
    %732 = vmatprep.subr.bf16.mxu0 0
    %733 = vmatpush1.bf16.xpose.msra.mxu0 0
    %734 = vmatprep.subr.bf16.mxu0 0
    %735 = vmatpush1.bf16.xpose.msra.mxu0 0
    %736 = vmatprep.subr.bf16.mxu0 0
    %737 = vmatpush1.bf16.xpose.msra.mxu0 0
    %738 = vmatprep.subr.bf16.mxu0 0
    %739 = vmatpush1.bf16.xpose.msra.mxu0 0
    %740 = vmatprep.subr.bf16.mxu0 0
    %741 = vmatpush1.bf16.xpose.msra.mxu0 0
    %742 = vmatprep.mubr.bf16.mxu0 0
    %743 = vmatmul.mubr.bf16.gmra.mrb[0].mxu0 %v702
    %v744 = vpop.f32.mrb[0].mxu0
    %v745 = vadd.f32 %v26, %v744
    %v746 = vpop.f32.mrb[0].mxu0
    %v747 = vpop.f32.mrb[0].mxu0
    %v748 = vpop.f32.mrb[0].mxu0
    %749 = vdwg.mxu0
    %v750 = vsel %vm75, %v745, -inf
    %751 = vmax.xlane.f32.xlu0 %v750
    %v752 = vpop.xlane.xlu0 %751
    %v753 = vsub.f32 %v745, %v752
    %v754 = vmul.f32 %v753, 1.442695
    %v755 = vpow.pop %v754
    %v756 = vpack.c.bf16 %v755, %v755
    %v758 = vsel %vm75, %v756, 0
    %760 = vmatprep.subr.bf16.mxu0 0
    %761 = vmatpush1.bf16.msra.mxu0 %v37
    %762 = vmatprep.subr.bf16.mxu0 0
    %763 = vmatpush1.bf16.msra.mxu0 %v38
    %764 = vmatprep.subr.bf16.mxu0 0
    %765 = vmatpush1.bf16.msra.mxu0 0
    %766 = vmatprep.subr.bf16.mxu0 0
    %767 = vmatpush1.bf16.msra.mxu0 0
    %768 = vmatprep.subr.bf16.mxu0 0
    %769 = vmatpush1.bf16.msra.mxu0 0
    %770 = vmatprep.subr.bf16.mxu0 0
    %771 = vmatpush1.bf16.msra.mxu0 0
    %772 = vmatprep.subr.bf16.mxu0 0
    %773 = vmatpush1.bf16.msra.mxu0 0
    %774 = vmatprep.subr.bf16.mxu0 0
    %775 = vmatpush1.bf16.msra.mxu0 0
    %776 = vmatprep.subr.bf16.mxu0 0
    %777 = vmatpush1.bf16.msra.mxu0 0
    %778 = vmatprep.subr.bf16.mxu0 0
    %779 = vmatpush1.bf16.msra.mxu0 0
    %780 = vmatprep.subr.bf16.mxu0 0
    %781 = vmatpush1.bf16.msra.mxu0 0
    %782 = vmatprep.subr.bf16.mxu0 0
    %783 = vmatpush1.bf16.msra.mxu0 0
    %784 = vmatprep.subr.bf16.mxu0 0
    %785 = vmatpush1.bf16.msra.mxu0 0
    %786 = vmatprep.subr.bf16.mxu0 0
    %787 = vmatpush1.bf16.msra.mxu0 0
    %788 = vmatprep.subr.bf16.mxu0 0
    %789 = vmatpush1.bf16.msra.mxu0 0
    %790 = vmatprep.subr.bf16.mxu0 0
    %791 = vmatpush1.bf16.msra.mxu0 0
    %792 = vmatprep.mubr.bf16.mxu0 0
    %793 = vmatmul.mubr.bf16.gmra.mrb[0].mxu0 %v758
    %v794 = vpop.f32.mrb[0].mxu0
    %v795 = vadd.f32 0.0, %v794
    %v796 = vpop.f32.mrb[0].mxu0
    %v797 = vpop.f32.mrb[0].mxu0
    %v798 = vpop.f32.mrb[0].mxu0
    %799 = vdwg.mxu0
    %v800 = vrcp.pop %v795
    %v801 = vmul.f32 %v755, %v800
    %v802 = vpack.c.bf16 %v801, %v801
    %805 = vrot.lane.b32.xlu0 %v699, 96
    %v806 = vpop.permute.xlu0 %805
    %807 = vrot.lane.b32.xlu0 %v700, 96
    %v808 = vpop.permute.xlu0 %807
    %v812 = vsel %vm75, %v802, 0
    %814 = vmatprep.subr.bf16.mxu0 0
    %815 = vmatpush1.bf16.msra.mxu0 %v806
    %816 = vmatprep.subr.bf16.mxu0 0
    %817 = vmatpush1.bf16.msra.mxu0 %v808
    %818 = vmatprep.subr.bf16.mxu0 0
    %819 = vmatpush1.bf16.msra.mxu0 0
    %820 = vmatprep.subr.bf16.mxu0 0
    %821 = vmatpush1.bf16.msra.mxu0 0
    %822 = vmatprep.subr.bf16.mxu0 0
    %823 = vmatpush1.bf16.msra.mxu0 0
    %824 = vmatprep.subr.bf16.mxu0 0
    %825 = vmatpush1.bf16.msra.mxu0 0
    %826 = vmatprep.subr.bf16.mxu0 0
    %827 = vmatpush1.bf16.msra.mxu0 0
    %828 = vmatprep.subr.bf16.mxu0 0
    %829 = vmatpush1.bf16.msra.mxu0 0
    %830 = vmatprep.subr.bf16.mxu0 0
    %831 = vmatpush1.bf16.msra.mxu0 0
    %832 = vmatprep.subr.bf16.mxu0 0
    %833 = vmatpush1.bf16.msra.mxu0 0
    %834 = vmatprep.subr.bf16.mxu0 0
    %835 = vmatpush1.bf16.msra.mxu0 0
    %836 = vmatprep.subr.bf16.mxu0 0
    %837 = vmatpush1.bf16.msra.mxu0 0
    %838 = vmatprep.subr.bf16.mxu0 0
    %839 = vmatpush1.bf16.msra.mxu0 0
    %840 = vmatprep.subr.bf16.mxu0 0
    %841 = vmatpush1.bf16.msra.mxu0 0
    %842 = vmatprep.subr.bf16.mxu0 0
    %843 = vmatpush1.bf16.msra.mxu0 0
    %844 = vmatprep.subr.bf16.mxu0 0
    %845 = vmatpush1.bf16.msra.mxu0 0
    %846 = vmatprep.mubr.bf16.mxu0 0
    %847 = vmatmul.mubr.bf16.gmra.mrb[0].mxu0 %v812
    %v848 = vpop.f32.mrb[0].mxu0
    %v849 = vadd.f32 0.0, %v848
    %v850 = vpop.f32.mrb[0].mxu0
    %v851 = vpop.f32.mrb[0].mxu0
    %v852 = vpop.f32.mrb[0].mxu0
    %853 = vdwg.mxu0
    %v854 = vpack.c.bf16 %v849, %v849
    %v855 = vlaneseq
    %v856 = vshrl.u32 %v855, 7
    %v857 = vsub.s32 1, %v856
    %v858 = vrot.slane %v578, %v857
    %859 = vrot.lane.b32.xlu0 %v592, 32
    %v860 = vpop.permute.xlu0 %859
    %861 = vrot.lane.b32.xlu0 %v593, 32
    %v862 = vpop.permute.xlu0 %861
    %v866 = vsel %vm75, %v854, 0
    %868 = vmatprep.subr.bf16.mxu0 0
    %869 = vmatpush1.bf16.msra.mxu0 %v860
    %870 = vmatprep.subr.bf16.mxu0 0
    %871 = vmatpush1.bf16.msra.mxu0 %v862
    %872 = vmatprep.subr.bf16.mxu0 0
    %873 = vmatpush1.bf16.msra.mxu0 0
    %874 = vmatprep.subr.bf16.mxu0 0
    %875 = vmatpush1.bf16.msra.mxu0 0
    %876 = vmatprep.subr.bf16.mxu0 0
    %877 = vmatpush1.bf16.msra.mxu0 0
    %878 = vmatprep.subr.bf16.mxu0 0
    %879 = vmatpush1.bf16.msra.mxu0 0
    %880 = vmatprep.subr.bf16.mxu0 0
    %881 = vmatpush1.bf16.msra.mxu0 0
    %882 = vmatprep.subr.bf16.mxu0 0
    %883 = vmatpush1.bf16.msra.mxu0 0
    %884 = vmatprep.subr.bf16.mxu0 0
    %885 = vmatpush1.bf16.msra.mxu0 0
    %886 = vmatprep.subr.bf16.mxu0 0
    %887 = vmatpush1.bf16.msra.mxu0 0
    %888 = vmatprep.subr.bf16.mxu0 0
    %889 = vmatpush1.bf16.msra.mxu0 0
    %890 = vmatprep.subr.bf16.mxu0 0
    %891 = vmatpush1.bf16.msra.mxu0 0
    %892 = vmatprep.subr.bf16.mxu0 0
    %893 = vmatpush1.bf16.msra.mxu0 0
    %894 = vmatprep.subr.bf16.mxu0 0
    %895 = vmatpush1.bf16.msra.mxu0 0
    %896 = vmatprep.subr.bf16.mxu0 0
    %897 = vmatpush1.bf16.msra.mxu0 0
    %898 = vmatprep.subr.bf16.mxu0 0
    %899 = vmatpush1.bf16.msra.mxu0 0
    %900 = vmatprep.mubr.bf16.mxu0 0
    %901 = vmatmul.mubr.bf16.gmra.mrb[0].mxu0 %v866
    %v902 = vpop.f32.mrb[0].mxu0
    %v903 = vadd.f32 %v858, %v902
    %v904 = vpop.f32.mrb[0].mxu0
    %v905 = vpop.f32.mrb[0].mxu0
    %v906 = vpop.f32.mrb[0].mxu0
    %907 = vdwg.mxu0
    %v908 = vadd.f32 %v562, %v903
    %v909 = vsel %vm75, %v908, 0.0
    %910 = vadd.xlane.f32.xlu0 %v909
    %v911 = vpop.xlane.xlu0 %910
    %v912 = vmul.f32 %v911, %v400
    %v913 = vsub.f32 %v908, %v912
    %v914 = vmul.f32 %v913, %v913
    %v915 = vsel %vm75, %v914, 0.0
    %916 = vadd.xlane.f32.xlu0 %v915
    %v917 = vpop.xlane.xlu0 %916
    %v918 = vmul.f32 %v917, %v400
    %v919 = vadd.f32 %v918, 1e-05
    %v920 = vrsqrt.pop %v919
    %v921 = vmul.f32 %v913, %v920
    %v922 = vlaneseq
    %v923 = vshrl.u32 %v922, 7
    %v924 = vsub.s32 2, %v923
    %v925 = vrot.slane %v578, %v924
    %v926 = vmul.f32 %v921, %v925
    %v927 = vlaneseq
    %v928 = vshrl.u32 %v927, 7
    %v929 = vsub.s32 3, %v928
    %v930 = vrot.slane %v578, %v929
    %v931 = vadd.f32 %v926, %v930
    %v932 = vpack.c.bf16 %v931, %v931
    %v933 = vlaneseq
    %v934 = vshrl.u32 %v933, 7
    %v935 = vsub.s32 4, %v934
    %v936 = vrot.slane %v578, %v935
    %v941 = vunpack.c.l.b16 %v569
    %v942 = vunpack.c.l.b16 %v570
    %v943 = vunpack.c.l.b16 %v571
    %v944 = vunpack.c.l.b16 %v572
    %v945 = vpack.c.b16 %v942, %v941
    %v946 = vpack.c.b16 %v944, %v943
    %v950 = vsel %vm75, %v932, 0
    %952 = vmatprep.subr.bf16.mxu0 0
    %953 = vmatpush1.bf16.msra.mxu0 %v945
    %954 = vmatprep.subr.bf16.mxu0 0
    %955 = vmatpush1.bf16.msra.mxu0 %v946
    %956 = vmatprep.subr.bf16.mxu0 0
    %957 = vmatpush1.bf16.msra.mxu0 0
    %958 = vmatprep.subr.bf16.mxu0 0
    %959 = vmatpush1.bf16.msra.mxu0 0
    %960 = vmatprep.subr.bf16.mxu0 0
    %961 = vmatpush1.bf16.msra.mxu0 0
    %962 = vmatprep.subr.bf16.mxu0 0
    %963 = vmatpush1.bf16.msra.mxu0 0
    %964 = vmatprep.subr.bf16.mxu0 0
    %965 = vmatpush1.bf16.msra.mxu0 0
    %966 = vmatprep.subr.bf16.mxu0 0
    %967 = vmatpush1.bf16.msra.mxu0 0
    %968 = vmatprep.subr.bf16.mxu0 0
    %969 = vmatpush1.bf16.msra.mxu0 0
    %970 = vmatprep.subr.bf16.mxu0 0
    %971 = vmatpush1.bf16.msra.mxu0 0
    %972 = vmatprep.subr.bf16.mxu0 0
    %973 = vmatpush1.bf16.msra.mxu0 0
    %974 = vmatprep.subr.bf16.mxu0 0
    %975 = vmatpush1.bf16.msra.mxu0 0
    %976 = vmatprep.subr.bf16.mxu0 0
    %977 = vmatpush1.bf16.msra.mxu0 0
    %978 = vmatprep.subr.bf16.mxu0 0
    %979 = vmatpush1.bf16.msra.mxu0 0
    %980 = vmatprep.subr.bf16.mxu0 0
    %981 = vmatpush1.bf16.msra.mxu0 0
    %982 = vmatprep.subr.bf16.mxu0 0
    %983 = vmatpush1.bf16.msra.mxu0 0
    %984 = vmatprep.mubr.bf16.mxu0 0
    %985 = vmatmul.mubr.bf16.gmra.mrb[0].mxu0 %v950
    %v986 = vpop.f32.mrb[0].mxu0
    %v987 = vadd.f32 %v936, %v986
    %v988 = vpop.f32.mrb[0].mxu0
    %v989 = vpop.f32.mrb[0].mxu0
    %v990 = vpop.f32.mrb[0].mxu0
    %991 = vdwg.mxu0
    %v992 = vmax.f32 %v987, 0.0
    %v993 = vpack.c.bf16 %v992, %v992
    %v994 = vlaneseq
    %v995 = vshrl.u32 %v994, 7
    %v996 = vsub.s32 5, %v995
    %v997 = vrot.slane %v578, %v996
    %v1002 = vunpack.c.l.b16 %v573
    %v1003 = vunpack.c.l.b16 %v574
    %v1004 = vunpack.c.l.b16 %v575
    %v1005 = vunpack.c.l.b16 %v576
    %v1006 = vpack.c.b16 %v1003, %v1002
    %v1007 = vpack.c.b16 %v1005, %v1004
    %1010 = vmatprep.subr.bf16.mxu0 0
    %1011 = vmatpush1.bf16.xpose.msra.mxu0 %v1006
    %1012 = vmatprep.subr.bf16.mxu0 0
    %1013 = vmatpush1.bf16.xpose.msra.mxu0 %v1007
    %1014 = vmatprep.subr.bf16.mxu0 0
    %1015 = vmatpush1.bf16.xpose.msra.mxu0 0
    %1016 = vmatprep.subr.bf16.mxu0 0
    %1017 = vmatpush1.bf16.xpose.msra.mxu0 0
    %1018 = vmatprep.subr.bf16.mxu0 0
    %1019 = vmatpush1.bf16.xpose.msra.mxu0 0
    %1020 = vmatprep.subr.bf16.mxu0 0
    %1021 = vmatpush1.bf16.xpose.msra.mxu0 0
    %1022 = vmatprep.subr.bf16.mxu0 0
    %1023 = vmatpush1.bf16.xpose.msra.mxu0 0
    %1024 = vmatprep.subr.bf16.mxu0 0
    %1025 = vmatpush1.bf16.xpose.msra.mxu0 0
    %1026 = vmatprep.subr.bf16.mxu0 0
    %1027 = vmatpush1.bf16.xpose.msra.mxu0 0
    %1028 = vmatprep.subr.bf16.mxu0 0
    %1029 = vmatpush1.bf16.xpose.msra.mxu0 0
    %1030 = vmatprep.subr.bf16.mxu0 0
    %1031 = vmatpush1.bf16.xpose.msra.mxu0 0
    %1032 = vmatprep.subr.bf16.mxu0 0
    %1033 = vmatpush1.bf16.xpose.msra.mxu0 0
    %1034 = vmatprep.subr.bf16.mxu0 0
    %1035 = vmatpush1.bf16.xpose.msra.mxu0 0
    %1036 = vmatprep.subr.bf16.mxu0 0
    %1037 = vmatpush1.bf16.xpose.msra.mxu0 0
    %1038 = vmatprep.subr.bf16.mxu0 0
    %1039 = vmatpush1.bf16.xpose.msra.mxu0 0
    %1040 = vmatprep.subr.bf16.mxu0 0
    %1041 = vmatpush1.bf16.xpose.msra.mxu0 0
    %1042 = vmatprep.mubr.bf16.mxu0 0
    %1043 = vmatmul.mubr.bf16.gmra.mrb[0].mxu0 %v993
    %v1044 = vpop.f32.mrb[0].mxu0
    %v1045 = vadd.f32 %v997, %v1044
    %v1046 = vpop.f32.mrb[0].mxu0
    %v1047 = vpop.f32.mrb[0].mxu0
    %v1048 = vpop.f32.mrb[0].mxu0
    %1049 = vdwg.mxu0
    %v1050 = vadd.f32 %v931, %v1045
    %v1051 = vsel %vm75, %v1050, 0.0
    %1052 = vadd.xlane.f32.xlu0 %v1051
    %v1053 = vpop.xlane.xlu0 %1052
    %v1054 = vmul.f32 %v1053, %v400
    %v1055 = vsub.f32 %v1050, %v1054
    %v1056 = vmul.f32 %v1055, %v1055
    %v1057 = vsel %vm75, %v1056, 0.0
    %1058 = vadd.xlane.f32.xlu0 %v1057
    %v1059 = vpop.xlane.xlu0 %1058
    %v1060 = vmul.f32 %v1059, %v400
    %v1061 = vadd.f32 %v1060, 1e-05
    %v1062 = vrsqrt.pop %v1061
    %v1063 = vmul.f32 %v1055, %v1062
    %v1064 = vlaneseq
    %v1065 = vshrl.u32 %v1064, 7
    %v1066 = vsub.s32 6, %v1065
    %v1067 = vrot.slane %v578, %v1066
    %v1068 = vmul.f32 %v1063, %v1067
    %v1069 = vlaneseq
    %v1070 = vshrl.u32 %v1069, 7
    %v1071 = vsub.s32 7, %v1070
    %v1072 = vrot.slane %v578, %v1071
    %v1073 = vadd.f32 %v1068, %v1072
    %v1074 = vld [vmem:[%s5] sm:$0xff]
    %v1075 = vld [vmem:[%s5 + $0x8] sm:$0xff]
    %v1076 = vld [vmem:[%s5 + $0x10] sm:$0xff]
    %v1077 = vld [vmem:[%s5 + $0x18] sm:$0xff]
    %v1078 = vpack.c.bf16 %v1073, %v1073
    %v1079 = vpack.c.bf16 %v1075, %v1074
    %v1080 = vpack.c.bf16 %v1077, %v1076
    %v1081 = vld [vmem:[%s5 + $0x20] sm:$0x1]
    %v1082 = vlaneseq
    %v1083 = vshrl.u32 %v1082, 7
    %v1084 = vsub.s32 0, %v1083
    %v1085 = vrot.slane %v1081, %v1084
    %v1087 = vsel %vm75, %v1078, 0
    %1089 = vmatprep.subr.bf16.mxu0 0
    %1090 = vmatpush1.bf16.msra.mxu0 %v1079
    %1091 = vmatprep.subr.bf16.mxu0 0
    %1092 = vmatpush1.bf16.msra.mxu0 %v1080
    %1093 = vmatprep.subr.bf16.mxu0 0
    %1094 = vmatpush1.bf16.msra.mxu0 0
    %1095 = vmatprep.subr.bf16.mxu0 0
    %1096 = vmatpush1.bf16.msra.mxu0 0
    %1097 = vmatprep.subr.bf16.mxu0 0
    %1098 = vmatpush1.bf16.msra.mxu0 0
    %1099 = vmatprep.subr.bf16.mxu0 0
    %1100 = vmatpush1.bf16.msra.mxu0 0
    %1101 = vmatprep.subr.bf16.mxu0 0
    %1102 = vmatpush1.bf16.msra.mxu0 0
    %1103 = vmatprep.subr.bf16.mxu0 0
    %1104 = vmatpush1.bf16.msra.mxu0 0
    %1105 = vmatprep.subr.bf16.mxu0 0
    %1106 = vmatpush1.bf16.msra.mxu0 0
    %1107 = vmatprep.subr.bf16.mxu0 0
    %1108 = vmatpush1.bf16.msra.mxu0 0
    %1109 = vmatprep.subr.bf16.mxu0 0
    %1110 = vmatpush1.bf16.msra.mxu0 0
    %1111 = vmatprep.subr.bf16.mxu0 0
    %1112 = vmatpush1.bf16.msra.mxu0 0
    %1113 = vmatprep.subr.bf16.mxu0 0
    %1114 = vmatpush1.bf16.msra.mxu0 0
    %1115 = vmatprep.subr.bf16.mxu0 0
    %1116 = vmatpush1.bf16.msra.mxu0 0
    %1117 = vmatprep.subr.bf16.mxu0 0
    %1118 = vmatpush1.bf16.msra.mxu0 0
    %1119 = vmatprep.subr.bf16.mxu0 0
    %1120 = vmatpush1.bf16.msra.mxu0 0
    %1121 = vmatprep.mubr.bf16.mxu0 0
    %1122 = vmatmul.mubr.bf16.gmra.mrb[0].mxu0 %v1087
    %v1123 = vpop.f32.mrb[0].mxu0
    %v1124 = vadd.f32 %v1085, %v1123
    %v1125 = vpop.f32.mrb[0].mxu0
    %v1126 = vpop.f32.mrb[0].mxu0
    %v1127 = vpop.f32.mrb[0].mxu0
    %1128 = vdwg.mxu0
    %1129 = vst [vmem:[#allocation2] sm:$0xff] %v1124
    // Predicated region
    $region26: #{causal_transformer_forward.1} parent=1 // pred_check
      _
    $region27: #{causal_transformer_forward.1} parent=1 // pred_check_branch
      %1131 = sbr.rel (0) target = $region29
    $region28: #{causal_transformer_forward.1} parent=1 // pred_region
      %s1133 = ssub.s32 128, 128
      %1134 = vsyncadd [#allocation3], %s1133
      %s1136 = sshll.u32 [#allocation2], 4
      %s1137 = int_to_ptr.vmem [resolvable:$true] %s1136
      %1139 = dma.vmem_to_hbm [thread:$0]  %s1137, 128, %s6, [#allocation3]
    $region29: #{causal_transformer_forward.1} parent=1 // pred_fallthru
      _
    // Predicated region
    $region30: #{causal_transformer_forward.1} parent=1 // pred_check
      _
    $region31: #{causal_transformer_forward.1} parent=1 // pred_check_branch
      %1141 = sbr.rel (0) target = $region33
    $region32: #{causal_transformer_forward.1} parent=1 // pred_region
      %1142 = dma.done [#allocation3], 128
    $region33: #{causal_transformer_forward.1} parent=1 // pred_fallthru
      _
    %1143 = vsyncpa [#allocation3], 1

</llo_original>
